<compile_context>
chip_gen: v7x
topology: tpu7x:2x2x1
jax: 0.10.0
libtpu: 0.0.40
codegen_flags: <defaults>
</compile_context>

<pallas_src>
import math
from functools import partial

import jax
import jax.numpy as jnp
from jax.experimental import pallas as pl
from jax.experimental.pallas import tpu as pltpu


# ---------------------------------------------------------------------------
# Helpers
# ---------------------------------------------------------------------------
def _pick_tile(dim, pref, align=1):
    """Largest divisor of `dim` that is <= pref and a multiple of `align`.

    Only falls back to the full dim (always a legal block) when no aligned
    divisor exists (e.g. prime dims) — fixes the old "whole dim whenever pref
    does not divide" VMEM blow-up."""
    upper = min(pref, dim)
    for cand in range(upper, 0, -1):
        if dim % cand == 0 and (cand % align == 0 or cand == dim):
            return cand
    return dim


def _vmem_budget_bytes():
    """Per-generation VMEM budget: ~75% of physical capacity, leaving headroom
    for compiler-internal scratch (≈48 MiB on v7x, ≈96 MiB on v5e/v6e)."""
    cap = 128 << 20
    try:
        info = pltpu.get_tpu_info()
        cap = int(getattr(info, "vmem_capacity_bytes", cap) or cap)
    except Exception:
        pass
    return (cap * 3) // 4


def _vmem_limit(block_bytes):
    budget = _vmem_budget_bytes()
    want = 3 * int(block_bytes) + (8 << 20)   # double buffers + headroom
    return int(min(max(want, 32 << 20), budget))


# ---------------------------------------------------------------------------
# Tiled linear projection:  y = x @ w.T + b   (PyTorch nn.Linear semantics)
# M x N x K grid, f32 accumulator over the K ("arbitrary") axis.
# ---------------------------------------------------------------------------
def _linear_kernel(x_ref, w_ref, b_ref, o_ref, acc_ref, *, matmul_dtype):
    kk = pl.program_id(2)

    @pl.when(kk == 0)
    def _():
        acc_ref[...] = jnp.zeros_like(acc_ref)

    x = x_ref[...].astype(matmul_dtype)          # (tm, tk)
    w = w_ref[...].astype(matmul_dtype)          # (tn, tk)
    # contract K with K — no w.T materialization
    acc_ref[...] += jax.lax.dot_general(
        x, w, (((1,), (1,)), ((), ())), preferred_element_type=jnp.float32)

    @pl.when(kk == pl.num_programs(2) - 1)
    def _():
        o_ref[...] = (acc_ref[...] + b_ref[...]).astype(o_ref.dtype)


def linear(x2d, w, b, *, out_dtype, matmul_dtype=jnp.float32,
           tm_pref=512, tn_pref=256, tk_pref=512):
    M, K = x2d.shape
    N = w.shape[0]
    tm = _pick_tile(M, tm_pref, align=8)
    tn = _pick_tile(N, tn_pref, align=128)
    tk = _pick_tile(K, tk_pref, align=128)
    grid = (M // tm, N // tn, K // tk)

    isz = jnp.dtype(matmul_dtype).itemsize
    block_bytes = isz * (tm * tk + tn * tk) + 4 * (2 * tm * tn + tn)
    cost = pl.CostEstimate(
        flops=int(2 * M * N * K), transcendentals=0,
        bytes_accessed=int(x2d.size * x2d.dtype.itemsize
                           + w.size * w.dtype.itemsize + 4 * N
                           + M * N * jnp.dtype(out_dtype).itemsize))

    return pl.pallas_call(
        partial(_linear_kernel, matmul_dtype=matmul_dtype),
        out_shape=jax.ShapeDtypeStruct((M, N), out_dtype),
        grid=grid,
        in_specs=[
            pl.BlockSpec((tm, tk), lambda i, j, k: (i, k)),
            pl.BlockSpec((tn, tk), lambda i, j, k: (j, k)),
            pl.BlockSpec((1, tn), lambda i, j, k: (0, j)),
        ],
        out_specs=pl.BlockSpec((tm, tn), lambda i, j, k: (i, j)),
        scratch_shapes=[pltpu.VMEM((tm, tn), jnp.float32)],
        compiler_params=pltpu.CompilerParams(
            dimension_semantics=("parallel", "parallel", "arbitrary"),
            vmem_limit_bytes=_vmem_limit(block_bytes)),
        cost_estimate=cost,
    )(x2d, w, b.reshape(1, N).astype(jnp.float32))


# ---------------------------------------------------------------------------
# Flash-style scaled dot-product attention
#   grid = (B, Sq_tiles, H, Sk_tiles);  out = (B, Sq, H*dk) lane-dense
#   scratch: acc (H, tq, dk) f32, m/l (tq, 1) f32 (reset per head at ki==0)
# ---------------------------------------------------------------------------
def _flash_attention_kernel(q_ref, k_ref, v_ref, *rest,
                            has_mask, matmul_dtype, approx_recip):
    if has_mask:
        mask_ref, o_ref, acc_ref, m_ref, l_ref = rest
    else:
        mask_ref = None
        o_ref, acc_ref, m_ref, l_ref = rest

    h = pl.program_id(2)
    ki = pl.program_id(3)
    nk = pl.num_programs(3)
    num_heads, tq, dk = acc_ref.shape

    @pl.when(ki == 0)
    def _():
        # -1e30 (finite) init keeps alpha = exp(old - new) exactly 0 on the
        # first tile with no inf-inf hazards, even for fully masked rows.
        m_ref[...] = jnp.full(m_ref.shape, -1e30, jnp.float32)
        l_ref[...] = jnp.zeros(l_ref.shape, jnp.float32)
        acc_ref[h] = jnp.zeros((tq, dk), jnp.float32)

    q = q_ref[0, :, 0, 0, :].astype(matmul_dtype)   # (tq, dk), pre-scaled by 1/sqrt(dk)
    k = k_ref[0, :, 0, 0, :].astype(matmul_dtype)   # (tk, dk)
    v = v_ref[0, :, 0, 0, :].astype(matmul_dtype)   # (tk, dk)

    # scores = q @ k.T expressed as a dk/dk contraction (no explicit transpose)
    s = jax.lax.dot_general(q, k, (((1,), (1,)), ((), ())),
                            preferred_element_type=jnp.float32)   # (tq, tk)
    if has_mask:
        # int8 mask tile, applied in-kernel (cheap VPU cmp+select) — matches
        # torch masked_fill(mask == 0, -1e9); finite so all-masked rows stay
        # NaN-free (uniform over masked positions, like the reference).
        s = jnp.where(mask_ref[0] != 0, s, jnp.float32(-1e9))

    m_prev = m_ref[...]
    m_new = jnp.maximum(m_prev, jnp.max(s, axis=-1, keepdims=True))
    alpha = jnp.exp(m_prev - m_new)
    e = jnp.exp(s - m_new)
    l_ref[...] = alpha * l_ref[...] + jnp.sum(e, axis=-1, keepdims=True)
    acc_ref[h] = alpha * acc_ref[h] + jnp.dot(
        e.astype(matmul_dtype), v, preferred_element_type=jnp.float32)
    m_ref[...] = m_new

    @pl.when(ki == nk - 1)
    def _():
        # deferred softmax normalization on the (tq, dk) accumulator; approx
        # reciprocal routes to the otherwise-idle EUP vrcp slot.
        acc_ref[h] = acc_ref[h] * pl.reciprocal(l_ref[...], approx=approx_recip)

    @pl.when(jnp.logical_and(ki == nk - 1, h == num_heads - 1))
    def _():
        # single lane-dense (tq, H*dk = D) store — no per-head dk-wide masked
        # stores; HBM writeback of the output block is one contiguous DMA.
        out = jnp.concatenate([acc_ref[hh] for hh in range(num_heads)], axis=-1)
        o_ref[0] = out.astype(o_ref.dtype)


def flash_attention(q_arr, k_arr, v_arr, mask_i8, ci, *, out_dtype,
                    matmul_dtype=jnp.float32, block_q=256, block_k=256,
                    approx_recip=True):
    """q_arr/k_arr/v_arr: (B, S, C, H, dk); ci = channel index of q/k/v along
    dim 2 (lets the fused QKV / KV arrays be passed multiple times and sliced
    purely by BlockSpec index maps — no wrapper slicing or head transposes)."""
    B, Sq, _, H, dk = q_arr.shape
    Sk = k_arr.shape[1]
    D = H * dk
    ci_q, ci_k, ci_v = ci

    tq = _pick_tile(Sq, block_q, align=8)
    tk = _pick_tile(Sk, block_k, align=128)
    grid = (B, Sq // tq, H, Sk // tk)
    has_mask = mask_i8 is not None

    def q_map(b, qi, hh, ki): return (b, qi, ci_q, hh, 0)
    def k_map(b, qi, hh, ki): return (b, ki, ci_k, hh, 0)
    def v_map(b, qi, hh, ki): return (b, ki, ci_v, hh, 0)
    def mask_map(b, qi, hh, ki): return (b, qi, ki)
    def o_map(b, qi, hh, ki): return (b, qi, 0)       # revisited over (h, ki)

    in_specs = [
        pl.BlockSpec((1, tq, 1, 1, dk), q_map),
        pl.BlockSpec((1, tk, 1, 1, dk), k_map),
        pl.BlockSpec((1, tk, 1, 1, dk), v_map),
    ]
    operands = [q_arr, k_arr, v_arr]
    if has_mask:
        in_specs.append(pl.BlockSpec((1, tq, tk), mask_map))
        operands.append(mask_i8)

    isz_in = jnp.dtype(q_arr.dtype).itemsize
    isz_out = jnp.dtype(out_dtype).itemsize
    block_bytes = (isz_in * (tq * dk + 2 * tk * dk)
                   + (tq * tk if has_mask else 0)
                   + isz_out * tq * D
                   + 4 * (H * tq * dk + 2 * tq)          # acc + m + l scratch
                   + 4 * 2 * tq * tk)                    # live s / e values
    cost = pl.CostEstimate(
        flops=int(4 * B * H * Sq * Sk * dk),
        transcendentals=int(B * H * Sq * Sk),
        bytes_accessed=int(isz_in * B * H * (Sq + 2 * Sk) * dk
                           + (B * Sq * Sk if has_mask else 0)
                           + isz_out * B * Sq * D))

    return pl.pallas_call(
        partial(_flash_attention_kernel, has_mask=has_mask,
                matmul_dtype=matmul_dtype, approx_recip=approx_recip),
        out_shape=jax.ShapeDtypeStruct((B, Sq, D), out_dtype),
        grid=grid,
        in_specs=in_specs,
        out_specs=pl.BlockSpec((1, tq, D), o_map),
        scratch_shapes=[
            pltpu.VMEM((H, tq, dk), jnp.float32),   # per-head accumulators
            pltpu.VMEM((tq, 1), jnp.float32),       # running max m
            pltpu.VMEM((tq, 1), jnp.float32),       # running denom l
        ],
        compiler_params=pltpu.CompilerParams(
            dimension_semantics=("parallel", "parallel", "arbitrary", "arbitrary"),
            vmem_limit_bytes=_vmem_limit(block_bytes)),
        cost_estimate=cost,
    )(*operands)


# ---------------------------------------------------------------------------
# MultiHeadedAttention forward (wrapper / glue)
# ---------------------------------------------------------------------------
def multi_headed_attention(query, key, value, mask, params, h, *,
                           matmul_dtype=jnp.float32, block_q=256, block_k=256,
                           approx_recip=True):
    """Equivalent of MultiHeadedAttention(h, d_model).forward(query, key, value, mask)."""
    (wq, bq), (wk, bk), (wv, bv), (wo, bo) = params
    B, Sq, D = query.shape
    Sk = key.shape[1]
    dk = D // h
    scale = 1.0 / math.sqrt(dk)
    inter_dtype = matmul_dtype   # bf16 intermediates when matmul_dtype=bf16

    # Fold 1/sqrt(dk) into the Q projection (trace-time, removes the per-score scale).
    wq_s, bq_s = wq * scale, bq * scale

    q2d = query.reshape(B * Sq, D)
    k2d = key.reshape(B * Sk, D)
    v2d = value.reshape(B * Sk, D)

    # NOTE: fusion is selected by Python object identity; equal-but-distinct
    # arrays take the (numerically identical) unfused path.
    if query is key and key is value:
        # Self-attention: single fused (3D x D) projection — activations read once.
        w_qkv = jnp.concatenate([wq_s, wk, wv], axis=0).astype(matmul_dtype)
        b_qkv = jnp.concatenate([bq_s, bk, bv], axis=0)
        qkv5 = linear(q2d, w_qkv, b_qkv, out_dtype=inter_dtype,
                      matmul_dtype=matmul_dtype).reshape(B, Sq, 3, h, dk)
        q_arr = k_arr = v_arr = qkv5
        ci = (0, 1, 2)
    elif key is value:
        # Cross-attention over a shared memory: fuse the K/V projections.
        q_arr = linear(q2d, wq_s.astype(matmul_dtype), bq_s, out_dtype=inter_dtype,
                       matmul_dtype=matmul_dtype).reshape(B, Sq, 1, h, dk)
        w_kv = jnp.concatenate([wk, wv], axis=0).astype(matmul_dtype)
        b_kv = jnp.concatenate([bk, bv], axis=0)
        kv5 = linear(k2d, w_kv, b_kv, out_dtype=inter_dtype,
                     matmul_dtype=matmul_dtype).reshape(B, Sk, 2, h, dk)
        k_arr = v_arr = kv5
        ci = (0, 0, 1)
    else:
        q_arr = linear(q2d, wq_s.astype(matmul_dtype), bq_s, out_dtype=inter_dtype,
                       matmul_dtype=matmul_dtype).reshape(B, Sq, 1, h, dk)
        k_arr = linear(k2d, wk.astype(matmul_dtype), bk, out_dtype=inter_dtype,
                       matmul_dtype=matmul_dtype).reshape(B, Sk, 1, h, dk)
        v_arr = linear(v2d, wv.astype(matmul_dtype), bv, out_dtype=inter_dtype,
                       matmul_dtype=matmul_dtype).reshape(B, Sk, 1, h, dk)
        ci = (0, 0, 0)

    # int8 mask (4x less HBM traffic than an f32 bias); None -> no mask operand.
    mask_i8 = None
    if mask is not None:
        mask_i8 = jnp.broadcast_to(mask, (B, Sq, Sk)).astype(jnp.int8)

    attn = flash_attention(q_arr, k_arr, v_arr, mask_i8, ci,
                           out_dtype=inter_dtype, matmul_dtype=matmul_dtype,
                           block_q=block_q, block_k=block_k,
                           approx_recip=approx_recip)          # (B, Sq, D)

    # (B, Sq, H*dk) is already the lane-dense row layout torch gets from
    # x.transpose(1,2).contiguous().view(...): plain reshape, no HBM transpose.
    out = linear(attn.reshape(B * Sq, D), wo.astype(matmul_dtype), bo,
                 out_dtype=jnp.float32, matmul_dtype=matmul_dtype)
    return out.reshape(B, Sq, D)


# ---------------------------------------------------------------------------
# Pure-JAX reference (for correctness check)
# ---------------------------------------------------------------------------
def reference(query, key, value, mask, params, h):
    (wq, bq), (wk, bk), (wv, bv), (wo, bo) = params
    B, Sq, D = query.shape
    Sk = key.shape[1]
    dk = D // h

    def proj(x, w, b, s_len):
        return (x @ w.T + b).reshape(B, s_len, h, dk).transpose(0, 2, 1, 3)

    q = proj(query, wq, bq, Sq)
    k = proj(key, wk, bk, Sk)
    v = proj(value, wv, bv, Sk)
    scores = jnp.einsum("bhqd,bhkd->bhqk", q, k) / math.sqrt(dk)
    if mask is not None:
        scores = jnp.where(mask[:, None, :, :] == 0, -1e9, scores)
    p = jax.nn.softmax(scores, axis=-1)
    x = jnp.einsum("bhqk,bhkd->bhqd", p, v)
    x = x.transpose(0, 2, 1, 3).reshape(B, Sq, D)
    return x @ wo.T + bo


# ---------------------------------------------------------------------------
# Main
# ---------------------------------------------------------------------------
if __name__ == "__main__":
    # Small but tiling-exercising shapes: d_model=128 (lane-dense output slab),
    # 4 heads (d_k=32), seq=256 with 128-wide tiles -> 2 q-tiles x 2 kv-tiles,
    # so the online-softmax accumulation across KV tiles is actually tested.
    B, S, D, H = 2, 256, 128, 4
    BQ = BK = 128

    key0 = jax.random.PRNGKey(0)
    keys = jax.random.split(key0, 12)

    def make_linear_params(kw, kb, dout, din):
        bound = 1.0 / math.sqrt(din)
        w = jax.random.uniform(kw, (dout, din), jnp.float32, -bound, bound)
        b = jax.random.uniform(kb, (dout,), jnp.float32, -bound, bound)
        return w, b

    params = tuple(
        make_linear_params(keys[2 * i], keys[2 * i + 1], D, D) for i in range(4)
    )

    x_self = jax.random.normal(keys[8], (B, S, D), jnp.float32)
    query = jax.random.normal(keys[9], (B, S, D), jnp.float32)
    key_t = jax.random.normal(keys[10], (B, S, D), jnp.float32)
    value = jax.random.normal(keys[11], (B, S, D), jnp.float32)

    # causal mask [B, Sq, Sk] (1 = attend, 0 = masked), broadcast over heads
    mask = jnp.tril(jnp.ones((S, S), jnp.int32))[None].repeat(B, axis=0)

    run = partial(multi_headed_attention, params=params, h=H,
                  block_q=BQ, block_k=BK)

    # 1) Self-attention: fused-QKV projection, causal mask, f32 operands.
    out_self = jax.block_until_ready(run(x_self, x_self, x_self, mask))
    ref_self = reference(x_self, x_self, x_self, mask, params, H)
    assert out_self.shape == (B, S, D)
    assert jnp.allclose(out_self, ref_self, atol=5e-3, rtol=5e-3), \
        "self-attention mismatch vs reference"

    # 2) Cross-attention with distinct q/k/v: unfused projection path.
    out_cross = jax.block_until_ready(run(query, key_t, value, mask))
    ref_cross = reference(query, key_t, value, mask, params, H)
    assert jnp.allclose(out_cross, ref_cross, atol=5e-3, rtol=5e-3), \
        "cross-attention mismatch vs reference"

    # 3) mask=None: kernel variant with no mask operand / no mask DMA.
    out_nomask = jax.block_until_ready(run(x_self, x_self, x_self, None))
    ref_nomask = reference(x_self, x_self, x_self, None, params, H)
    assert jnp.allclose(out_nomask, ref_nomask, atol=5e-3, rtol=5e-3), \
        "no-mask mismatch vs reference"

    # 4) bf16 MXU operands + bf16-stored intermediates, f32 softmax/accum.
    out_bf16 = jax.block_until_ready(
        run(x_self, x_self, x_self, mask, matmul_dtype=jnp.bfloat16))
    assert jnp.allclose(out_bf16, ref_self, atol=1e-1, rtol=1e-1), \
        "bf16 path mismatch vs reference"

    print("KERNEL_OK")
</pallas_src>

<mosaic_0001>
module attributes {stable_mosaic.version = 11 : i64} {
  func.func @_linear_kernel(%arg0: i32, %arg1: i32, %arg2: i32, %arg3: memref<512x128xf32, #tpu.memory_space<vmem>>, %arg4: memref<128x128xf32, #tpu.memory_space<vmem>>, %arg5: memref<1x128xf32, #tpu.memory_space<vmem>>, %arg6: memref<512x128xf32, #tpu.memory_space<vmem>>, %arg7: memref<512x128xf32, #tpu.memory_space<vmem>>) attributes {dimension_semantics = [#tpu.dimension_semantics<parallel>, #tpu.dimension_semantics<parallel>, #tpu.dimension_semantics<arbitrary>], iteration_bounds = array<i64: 1, 3, 1>, scalar_prefetch = 0 : i64, scratch_operands = 1 : i64, tpu.core_type = #tpu.core_type<tc>, window_params = [{transform_indices = @transform_0, window_bounds = array<i64: 512, 128>}, {transform_indices = @transform_1, window_bounds = array<i64: 128, 128>}, {transform_indices = @transform_2, window_bounds = array<i64: 1, 128>}, {transform_indices = @transform_3, window_bounds = array<i64: 512, 128>}]} {
    %c0_i32 = arith.constant 0 : i32
    %0 = arith.cmpi eq, %arg2, %c0_i32 : i32
    %1 = arith.extui %0 : i1 to i32
    %c0_i32_0 = arith.constant 0 : i32
    %2 = arith.cmpi ne, %1, %c0_i32_0 : i32
    scf.if %2 {
      %cst_10 = arith.constant 0.000000e+00 : f32
      %12 = vector.broadcast %cst_10 : f32 to vector<512x128xf32>
      %c0_11 = arith.constant 0 : index
      %c0_12 = arith.constant 0 : index
      %13 = vector.load %arg7[%c0_11, %c0_12] : memref<512x128xf32, #tpu.memory_space<vmem>>, vector<512x128xf32>
      tpu.vector_store %arg7[%c0_11, %c0_12], %12 {strides = array<i32>} : memref<512x128xf32, #tpu.memory_space<vmem>>, vector<512x128xf32>,
    } else {
    }
    %c0 = arith.constant 0 : index
    %c0_1 = arith.constant 0 : index
    %3 = vector.load %arg3[%c0, %c0_1] : memref<512x128xf32, #tpu.memory_space<vmem>>, vector<512x128xf32>
    %c0_2 = arith.constant 0 : index
    %c0_3 = arith.constant 0 : index
    %4 = vector.load %arg4[%c0_2, %c0_3] : memref<128x128xf32, #tpu.memory_space<vmem>>, vector<128x128xf32>
    %c0_4 = arith.constant 0 : index
    %c0_5 = arith.constant 0 : index
    %5 = vector.load %arg7[%c0_4, %c0_5] : memref<512x128xf32, #tpu.memory_space<vmem>>, vector<512x128xf32>
    %cst = arith.constant dense<0.000000e+00> : vector<512x128xf32>
    %6 = tpu.matmul %3, %4, %cst {dimension_numbers = #tpu.dot_dimension_numbers<[1], [1], [0], [0], [0, 0, 1, 0], [], []>} : vector<512x128xf32>, vector<128x128xf32>, vector<512x128xf32> -> vector<512x128xf32>
    %7 = arith.addf %5, %6 : vector<512x128xf32>
    %c0_6 = arith.constant 0 : index
    %c0_7 = arith.constant 0 : index
    %8 = vector.load %arg7[%c0_6, %c0_7] : memref<512x128xf32, #tpu.memory_space<vmem>>, vector<512x128xf32>
    tpu.vector_store %arg7[%c0_6, %c0_7], %7 {strides = array<i32>} : memref<512x128xf32, #tpu.memory_space<vmem>>, vector<512x128xf32>,
    %c0_i32_8 = arith.constant 0 : i32
    %9 = arith.cmpi eq, %arg2, %c0_i32_8 : i32
    %10 = arith.extui %9 : i1 to i32
    %c0_i32_9 = arith.constant 0 : i32
    %11 = arith.cmpi ne, %10, %c0_i32_9 : i32
    scf.if %11 {
      %c0_10 = arith.constant 0 : index
      %c0_11 = arith.constant 0 : index
      %12 = vector.load %arg7[%c0_10, %c0_11] : memref<512x128xf32, #tpu.memory_space<vmem>>, vector<512x128xf32>
      %c0_12 = arith.constant 0 : index
      %c0_13 = arith.constant 0 : index
      %13 = vector.load %arg5[%c0_12, %c0_13] : memref<1x128xf32, #tpu.memory_space<vmem>>, vector<1x128xf32>
      %14 = vector.broadcast %13 : vector<1x128xf32> to vector<512x128xf32>
      %15 = arith.addf %12, %14 : vector<512x128xf32>
      %c0_14 = arith.constant 0 : index
      %c0_15 = arith.constant 0 : index
      %16 = vector.load %arg6[%c0_14, %c0_15] : memref<512x128xf32, #tpu.memory_space<vmem>>, vector<512x128xf32>
      tpu.vector_store %arg6[%c0_14, %c0_15], %15 {strides = array<i32>} : memref<512x128xf32, #tpu.memory_space<vmem>>, vector<512x128xf32>,
    } else {
    }
    return
  }
  func.func @transform_0(%arg0: i32, %arg1: i32, %arg2: i32) -> (i32, i32) {
    %c0_i32 = arith.constant 0 : i32
    return %arg0, %arg2 : i32, i32
  }
  func.func @transform_1(%arg0: i32, %arg1: i32, %arg2: i32) -> (i32, i32) {
    %c0_i32 = arith.constant 0 : i32
    return %arg1, %arg2 : i32, i32
  }
  func.func @transform_2(%arg0: i32, %arg1: i32, %arg2: i32) -> (i32, i32) {
    %c0_i32 = arith.constant 0 : i32
    %c0_i32_0 = arith.constant 0 : i32
    return %c0_i32, %arg1 : i32, i32
  }
  func.func @transform_3(%arg0: i32, %arg1: i32, %arg2: i32) -> (i32, i32) {
    %c0_i32 = arith.constant 0 : i32
    return %arg0, %arg1 : i32, i32
  }
}

</mosaic_0001>

<llo_original>
// kernel: tpu_custom_call.1
$region0: #{tpu_custom_call.1}
  #allocation0 [shape = 'u32[]', space=smem, size = 0x4, offset = 0x4, fixed_abs, tag = 'smem constant byte address 0x4 - core index']
  #allocation1 [shape = 'u32[144,128]{1,0:T(1,128)}', space=vmem, size = 0x12000, scoped, tag = 'internal scratch']
  #allocation2 [shape = 'f32[512,128]{1,0:T(8,128)}', space=vmem, size = 0x40000, scoped, tag = 'scratch operand']
  %s0 = inlined_call_operand.hbm [shape: f32[512,128], index: 0, kind: input, shape index: {}]
  %s1 = inlined_call_operand.hbm [shape: f32[384,128], index: 1, kind: input, shape index: {}]
  %s2 = inlined_call_operand.vmem [shape: f32[1,384], index: 2, kind: input, shape index: {}]
  %s3 = inlined_call_operand.hbm [shape: f32[512,384], index: 3, kind: output, shape index: {}]
  %s4 = sld [smem:[#allocation0]]
  $region61: #{tpu_custom_call.1} parent=0
    _
  %s6 = ssub.s32 1, %s4
  %s7 = scalar_select 0, %s6, %s4
  $region1: #{tpu_custom_call.1} parent=0
    #allocation3 [shape = 'u8[262144]{0}', space=vmem, size = 0x40000, scoped, tag = 'input window, operand 0, single buffered']
    #allocation4 [shape = 's32[2]{0}', space=sflag, size = 0x8, scoped, tag = 'scoped memory for tpu_custom_call.1']
    #allocation5 [shape = 's32[2]{0}', space=sflag, size = 0x8, scoped, tag = 'scoped memory for tpu_custom_call.1']
    #allocation6 [shape = 'u8[131072]{0}', space=vmem, size = 0x20000, scoped, tag = 'input window, operand 1']
    #allocation7 [shape = 's32[2]{0}', space=sflag, size = 0x8, scoped, tag = 'scoped memory for tpu_custom_call.1']
    #allocation8 [shape = 'u8[524288]{0}', space=vmem, size = 0x80000, scoped, tag = 'output window, operand 0']
    %8 = vsyncpa [#allocation4], 0
    %9 = vsyncpa [#allocation7], 0
    %s10 = scalar_lea.sflag [#allocation7], 1
    %11 = vsyncpa %s10, 0
    %12 = vsyncpa [#allocation5], 0
    %s13 = scalar_lea.sflag [#allocation5], 1
    %14 = vsyncpa %s13, 0
    loop: start=0, step=1, limit=5
    $region2: #{tpu_custom_call.1} parent=1 // loop_pre_header
      _
    $region3: #{tpu_custom_call.1} parent=1 // loop_header
      %s16 = sphi 0, %s20
      %p17 = scmp.ge.s32.totalorder %s16, 5
      %s23 = sphi 0, %s42
      %s24 = sphi 0, %s38
      %s25 = sphi 0, %s34
      %s26 = sphi 0, %s23
      %s27 = sphi 0, %s24
      %s28 = sphi 0, %s25
      %s29 = sphi 0, %s26
      %s30 = sphi 0, %s27
      %s31 = sphi 0, %s28
      %s47 = sphi 0, %s49
      %s50 = sphi 0, %s47
      %s51 = sphi 0, %s50
      %s67 = sphi 0, %s51
      %s75 = sphi 0, %s77
      %s78 = sphi 0, %s75
      %s79 = sphi 0, %s78
      %s95 = sphi 0, %s79
      %s101 = sphi 0, %s103
      %s104 = sphi 0, %s101
      %s105 = sphi 0, %s104
      %s121 = sphi 0, %s105
      %s129 = sphi 0, %s131
      %s132 = sphi 0, %s129
      %s133 = sphi 0, %s132
      %s149 = sphi 0, %s133
    $region4: #{tpu_custom_call.1} parent=1 // loop_header_branch
      %19 = sbr.rel (%p17) target = $region8
    $region5: #{tpu_custom_call.1} parent=1 // loop_body
      %s21 = ssub.s32 %s16, 1
      %s22 = ssub.s32 %s16, 2
      %s32 = sadd.s32 1, %s25
      %p33 = scmp.ge.s32.totalorder %s32, 1
      %s34 = scalar_select %p33, 0, %s32
      %s35 = sadd.s32 1, %s24
      %s36 = scalar_select %p33, %s35, %s24
      %p37 = scmp.ge.s32.totalorder %s36, 3
      %s38 = scalar_select %p37, 0, %s36
      %s39 = sadd.s32 1, %s23
      %s40 = scalar_select %p37, %s39, %s23
      %p41 = scmp.ge.s32.totalorder %s40, 1
      %s42 = scalar_select %p41, 0, %s40
      %s43 = ssub.s32 %s23, %s42
      %s44 = ssub.s32 %s25, %s34
      %s45 = sor.u32 %s43, %s44
      %p46 = scmp.eq.s32.totalorder %s45, 0
      %s48 = sadd.s32 %s47, 1
      %s49 = scalar_select %p46, %s47, %s48
      %p52 = pneg %p46
      %p53 = scmp.eq.s32.totalorder %s16, 2
      %p54 = por %p52, %p53
      %p55 = scmp.ne.s32.totalorder %s47, %s50
      %p56 = scmp.eq.s32.totalorder %s16, 0
      %p57 = por %p55, %p56
      %p58 = scmp.ne.s32.totalorder %s47, %s50
      %p59 = scmp.eq.s32.totalorder %s21, 2
      %p60 = por %p58, %p59
      %p61 = scmp.ne.s32.totalorder %s50, %s51
      %p62 = scmp.eq.s32.totalorder %s21, 0
      %p63 = por %p61, %p62
      %p64 = scmp.ne.s32.totalorder %s50, %s51
      %p65 = scmp.eq.s32.totalorder %s22, 2
      %p66 = por %p64, %p65
      %p68 = scmp.ne.s32.totalorder %s51, %s67
      %p69 = scmp.eq.s32.totalorder %s22, 0
      %p70 = por %p68, %p69
      %s71 = ssub.s32 %s24, %s38
      %s72 = ssub.s32 %s25, %s34
      %s73 = sor.u32 %s71, %s72
      %p74 = scmp.eq.s32.totalorder %s73, 0
      %s76 = sadd.s32 %s75, 1
      %s77 = scalar_select %p74, %s75, %s76
      %p80 = pneg %p74
      %p81 = scmp.eq.s32.totalorder %s16, 2
      %p82 = por %p80, %p81
      %p83 = scmp.ne.s32.totalorder %s75, %s78
      %p84 = scmp.eq.s32.totalorder %s16, 0
      %p85 = por %p83, %p84
      %p86 = scmp.ne.s32.totalorder %s75, %s78
      %p87 = scmp.eq.s32.totalorder %s21, 2
      %p88 = por %p86, %p87
      %p89 = scmp.ne.s32.totalorder %s78, %s79
      %p90 = scmp.eq.s32.totalorder %s21, 0
      %p91 = por %p89, %p90
      %p92 = scmp.ne.s32.totalorder %s78, %s79
      %p93 = scmp.eq.s32.totalorder %s22, 2
      %p94 = por %p92, %p93
      %p96 = scmp.ne.s32.totalorder %s79, %s95
      %p97 = scmp.eq.s32.totalorder %s22, 0
      %p98 = por %p96, %p97
      %s99 = ssub.s32 %s24, %s38
      %p100 = scmp.eq.s32.totalorder %s99, 0
      %s102 = sadd.s32 %s101, 1
      %s103 = scalar_select %p100, %s101, %s102
      %p106 = pneg %p100
      %p107 = scmp.eq.s32.totalorder %s16, 2
      %p108 = por %p106, %p107
      %p109 = scmp.ne.s32.totalorder %s101, %s104
      %p110 = scmp.eq.s32.totalorder %s16, 0
      %p111 = por %p109, %p110
      %p112 = scmp.ne.s32.totalorder %s101, %s104
      %p113 = scmp.eq.s32.totalorder %s21, 2
      %p114 = por %p112, %p113
      %p115 = scmp.ne.s32.totalorder %s104, %s105
      %p116 = scmp.eq.s32.totalorder %s21, 0
      %p117 = por %p115, %p116
      %p118 = scmp.ne.s32.totalorder %s104, %s105
      %p119 = scmp.eq.s32.totalorder %s22, 2
      %p120 = por %p118, %p119
      %p122 = scmp.ne.s32.totalorder %s105, %s121
      %p123 = scmp.eq.s32.totalorder %s22, 0
      %p124 = por %p122, %p123
      %s125 = ssub.s32 %s23, %s42
      %s126 = ssub.s32 %s24, %s38
      %s127 = sor.u32 %s125, %s126
      %p128 = scmp.eq.s32.totalorder %s127, 0
      %s130 = sadd.s32 %s129, 1
      %s131 = scalar_select %p128, %s129, %s130
      %p134 = pneg %p128
      %p135 = scmp.eq.s32.totalorder %s16, 2
      %p136 = por %p134, %p135
      %p137 = scmp.ne.s32.totalorder %s129, %s132
      %p138 = scmp.eq.s32.totalorder %s16, 0
      %p139 = por %p137, %p138
      %p140 = scmp.ne.s32.totalorder %s129, %s132
      %p141 = scmp.eq.s32.totalorder %s21, 2
      %p142 = por %p140, %p141
      %p143 = scmp.ne.s32.totalorder %s132, %s133
      %p144 = scmp.eq.s32.totalorder %s21, 0
      %p145 = por %p143, %p144
      %p146 = scmp.ne.s32.totalorder %s132, %s133
      %p147 = scmp.eq.s32.totalorder %s22, 2
      %p148 = por %p146, %p147
      %p150 = scmp.ne.s32.totalorder %s133, %s149
      %p151 = scmp.eq.s32.totalorder %s22, 0
      %p152 = por %p150, %p151
      %p153 = scmp.le.s32.totalorder 1, %s16
      %p154 = scmp.lt.s32.totalorder %s16, 4
      %p155 = pnand %p153, %p154
      %p156 = pneg %p155
      // Predicated region
      $region9: #{tpu_custom_call.1} parent=5 // pred_check
        _
      $region10: #{tpu_custom_call.1} parent=5 // pred_check_branch
        %158 = sbr.rel (%p155) target = $region12
      $region11: #{tpu_custom_call.1} parent=5 // pred_region
        %s159 = ssub.s32 %s16, 1
        // Predicated region
        $region13: #{tpu_custom_call.1} parent=11 // pred_check
          %p160 = pneg %p63
        $region14: #{tpu_custom_call.1} parent=11 // pred_check_branch
          %162 = sbr.rel (%p160) target = $region16
        $region15: #{tpu_custom_call.1} parent=11 // pred_region
          %s163 = smul.u32 64, %s26
          %s165 = ssub.s32 8192, 8192
          %166 = vsyncadd [#allocation4], %s165
          %s167 = sadd.s32 %s28, %s163
          %s168 = smul.addr %s167, 128
          %s169 = scalar_lea.hbm %s0, %s168
          %s170 = sshll.u32 [#allocation3], 4
          %s171 = int_to_ptr.vmem [resolvable:$true] %s170
          %176 = dma.hbm_to_vmem [thread:$0]  %s169, 8192, %s171, [#allocation4], 128, 128, 8
        $region16: #{tpu_custom_call.1} parent=11 // pred_fallthru
          _
      $region12: #{tpu_custom_call.1} parent=5 // pred_fallthru
        _
      %p177 = scmp.lt.s32.totalorder %s16, 3
      // Predicated region
      $region17: #{tpu_custom_call.1} parent=5 // pred_check
        %p178 = pneg %p177
      $region18: #{tpu_custom_call.1} parent=5 // pred_check_branch
        %180 = sbr.rel (%p178) target = $region20
      $region19: #{tpu_custom_call.1} parent=5 // pred_region
        // Predicated region
        $region21: #{tpu_custom_call.1} parent=19 // pred_check
          %p181 = pneg %p85
        $region22: #{tpu_custom_call.1} parent=19 // pred_check_branch
          %183 = sbr.rel (%p181) target = $region24
        $region23: #{tpu_custom_call.1} parent=19 // pred_region
          %s184 = sand.u32 %s75, 1
          %s185 = scalar_lea.sflag [#allocation7], %s184
          %s186 = sand.u32 %s75, 1
          %s187 = smul.addr %s186, 128
          %s188 = scalar_lea.vmem [#allocation6], %s187
          %s189 = smul.u32 16, %s24
          %s191 = ssub.s32 2048, 2048
          %192 = vsyncadd %s185, %s191
          %s193 = sadd.s32 %s25, %s189
          %s194 = smul.addr %s193, 128
          %s195 = scalar_lea.hbm %s1, %s194
          %s196 = sshll.u32 %s188, 4
          %s197 = int_to_ptr.vmem [resolvable:$true] %s196
          %202 = dma.hbm_to_vmem [thread:$0]  %s195, 2048, %s197, %s185, 128, 128, 8
        $region24: #{tpu_custom_call.1} parent=19 // pred_fallthru
          _
        // Predicated region
        $region25: #{tpu_custom_call.1} parent=19 // pred_check
          %p203 = pneg %p111
        $region26: #{tpu_custom_call.1} parent=19 // pred_check_branch
          %205 = sbr.rel (%p203) target = $region28
        $region27: #{tpu_custom_call.1} parent=19 // pred_region
          %p206 = scmp.lt.s32.totalorder %s24, 2
          %s207 = scalar_select %p206, %s24, 2
          %s208 = scalar_lea.vmem %s2, %s207
        $region28: #{tpu_custom_call.1} parent=19 // pred_fallthru
          _
      $region20: #{tpu_custom_call.1} parent=5 // pred_fallthru
        _
      %p209 = scmp.le.s32.totalorder 1, %s16
      %p210 = scmp.lt.s32.totalorder %s16, 4
      %p211 = pnand %p209, %p210
      %p212 = pneg %p211
      // Predicated region
      $region29: #{tpu_custom_call.1} parent=5 // pred_check
        _
      $region30: #{tpu_custom_call.1} parent=5 // pred_check_branch
        %214 = sbr.rel (%p211) target = $region32
      $region31: #{tpu_custom_call.1} parent=5 // pred_region
        %s215 = ssub.s32 %s16, 1
        // Predicated region
        $region33: #{tpu_custom_call.1} parent=31 // pred_check
          %p216 = pneg %p63
        $region34: #{tpu_custom_call.1} parent=31 // pred_check_branch
          %218 = sbr.rel (%p216) target = $region36
        $region35: #{tpu_custom_call.1} parent=31 // pred_region
          %219 = dma.done [#allocation4], 8192
        $region36: #{tpu_custom_call.1} parent=31 // pred_fallthru
          _
        %s220 = sand.u32 %s78, 1
        %s221 = scalar_lea.sflag [#allocation7], %s220
        %s222 = sand.u32 %s78, 1
        %s223 = smul.addr %s222, 128
        %s224 = scalar_lea.vmem [#allocation6], %s223
        // Predicated region
        $region37: #{tpu_custom_call.1} parent=31 // pred_check
          %p225 = pneg %p91
        $region38: #{tpu_custom_call.1} parent=31 // pred_check_branch
          %227 = sbr.rel (%p225) target = $region40
        $region39: #{tpu_custom_call.1} parent=31 // pred_region
          %228 = dma.done %s221, 2048
        $region40: #{tpu_custom_call.1} parent=31 // pred_fallthru
          _
        %p229 = pneg %p63
        %p230 = pneg %p60
        %s231 = sand.u32 %s78, 1
        %s232 = scalar_lea.sflag [#allocation7], %s231
        %s233 = sand.u32 %s78, 1
        %s234 = smul.addr %s233, 128
        %s235 = scalar_lea.vmem [#allocation6], %s234
        %p236 = pneg %p91
        %p237 = pneg %p88
        %p238 = scmp.lt.s32.totalorder %s27, 2
        %s239 = scalar_select %p238, %s27, 2
        %s240 = scalar_lea.vmem %s2, %s239
        %p241 = pneg %p117
        %p242 = pneg %p114
        %p243 = pneg %p145
        %p244 = pneg %p142
        %s245 = sand.u32 %s132, 1
        %s246 = scalar_lea.sflag [#allocation5], %s245
        %s247 = sand.u32 %s132, 1
        %s248 = smul.addr %s247, 512
        %s249 = scalar_lea.vmem [#allocation8], %s248
        %s250 = smul.u32 64, %s26
        %s251 = smul.u32 16, %s27
        %p252 = scmp.lt.s32.totalorder %s27, 2
        %s253 = scalar_select %p252, %s27, 2
        %s254 = scalar_lea.vmem %s2, %s253
        %s255 = smul.u32 64, %s26
        %p256 = scmp.eq.s32.totalorder %s28, 0
        // Predicated region
        $region41: #{tpu_custom_call.1} parent=31 // pred_check
          %p257 = pneg %p256
        $region42: #{tpu_custom_call.1} parent=31 // pred_check_branch
          %259 = sbr.rel (%p257) target = $region44
        $region43: #{tpu_custom_call.1} parent=31 // pred_region
          %260 = vst [vmem:[#allocation2] sm:$0xff] 0.0
          %261 = vst [vmem:[#allocation2 + $0x8] sm:$0xff] 0.0
          %262 = vst [vmem:[#allocation2 + $0x10] sm:$0xff] 0.0
          %263 = vst [vmem:[#allocation2 + $0x18] sm:$0xff] 0.0
          %264 = vst [vmem:[#allocation2 + $0x20] sm:$0xff] 0.0
          %265 = vst [vmem:[#allocation2 + $0x28] sm:$0xff] 0.0
          %266 = vst [vmem:[#allocation2 + $0x30] sm:$0xff] 0.0
          %267 = vst [vmem:[#allocation2 + $0x38] sm:$0xff] 0.0
          %268 = vst [vmem:[#allocation2 + $0x40] sm:$0xff] 0.0
          %269 = vst [vmem:[#allocation2 + $0x48] sm:$0xff] 0.0
          %270 = vst [vmem:[#allocation2 + $0x50] sm:$0xff] 0.0
          %271 = vst [vmem:[#allocation2 + $0x58] sm:$0xff] 0.0
          %272 = vst [vmem:[#allocation2 + $0x60] sm:$0xff] 0.0
          %273 = vst [vmem:[#allocation2 + $0x68] sm:$0xff] 0.0
          %274 = vst [vmem:[#allocation2 + $0x70] sm:$0xff] 0.0
          %275 = vst [vmem:[#allocation2 + $0x78] sm:$0xff] 0.0
          %276 = vst [vmem:[#allocation2 + $0x80] sm:$0xff] 0.0
          %277 = vst [vmem:[#allocation2 + $0x88] sm:$0xff] 0.0
          %278 = vst [vmem:[#allocation2 + $0x90] sm:$0xff] 0.0
          %279 = vst [vmem:[#allocation2 + $0x98] sm:$0xff] 0.0
          %280 = vst [vmem:[#allocation2 + $0xa0] sm:$0xff] 0.0
          %281 = vst [vmem:[#allocation2 + $0xa8] sm:$0xff] 0.0
          %282 = vst [vmem:[#allocation2 + $0xb0] sm:$0xff] 0.0
          %283 = vst [vmem:[#allocation2 + $0xb8] sm:$0xff] 0.0
          %284 = vst [vmem:[#allocation2 + $0xc0] sm:$0xff] 0.0
          %285 = vst [vmem:[#allocation2 + $0xc8] sm:$0xff] 0.0
          %286 = vst [vmem:[#allocation2 + $0xd0] sm:$0xff] 0.0
          %287 = vst [vmem:[#allocation2 + $0xd8] sm:$0xff] 0.0
          %288 = vst [vmem:[#allocation2 + $0xe0] sm:$0xff] 0.0
          %289 = vst [vmem:[#allocation2 + $0xe8] sm:$0xff] 0.0
          %290 = vst [vmem:[#allocation2 + $0xf0] sm:$0xff] 0.0
          %291 = vst [vmem:[#allocation2 + $0xf8] sm:$0xff] 0.0
          %292 = vst [vmem:[#allocation2 + $0x100] sm:$0xff] 0.0
          %293 = vst [vmem:[#allocation2 + $0x108] sm:$0xff] 0.0
          %294 = vst [vmem:[#allocation2 + $0x110] sm:$0xff] 0.0
          %295 = vst [vmem:[#allocation2 + $0x118] sm:$0xff] 0.0
          %296 = vst [vmem:[#allocation2 + $0x120] sm:$0xff] 0.0
          %297 = vst [vmem:[#allocation2 + $0x128] sm:$0xff] 0.0
          %298 = vst [vmem:[#allocation2 + $0x130] sm:$0xff] 0.0
          %299 = vst [vmem:[#allocation2 + $0x138] sm:$0xff] 0.0
          %300 = vst [vmem:[#allocation2 + $0x140] sm:$0xff] 0.0
          %301 = vst [vmem:[#allocation2 + $0x148] sm:$0xff] 0.0
          %302 = vst [vmem:[#allocation2 + $0x150] sm:$0xff] 0.0
          %303 = vst [vmem:[#allocation2 + $0x158] sm:$0xff] 0.0
          %304 = vst [vmem:[#allocation2 + $0x160] sm:$0xff] 0.0
          %305 = vst [vmem:[#allocation2 + $0x168] sm:$0xff] 0.0
          %306 = vst [vmem:[#allocation2 + $0x170] sm:$0xff] 0.0
          %307 = vst [vmem:[#allocation2 + $0x178] sm:$0xff] 0.0
          %308 = vst [vmem:[#allocation2 + $0x180] sm:$0xff] 0.0
          %309 = vst [vmem:[#allocation2 + $0x188] sm:$0xff] 0.0
          %310 = vst [vmem:[#allocation2 + $0x190] sm:$0xff] 0.0
          %311 = vst [vmem:[#allocation2 + $0x198] sm:$0xff] 0.0
          %312 = vst [vmem:[#allocation2 + $0x1a0] sm:$0xff] 0.0
          %313 = vst [vmem:[#allocation2 + $0x1a8] sm:$0xff] 0.0
          %314 = vst [vmem:[#allocation2 + $0x1b0] sm:$0xff] 0.0
          %315 = vst [vmem:[#allocation2 + $0x1b8] sm:$0xff] 0.0
          %316 = vst [vmem:[#allocation2 + $0x1c0] sm:$0xff] 0.0
          %317 = vst [vmem:[#allocation2 + $0x1c8] sm:$0xff] 0.0
          %318 = vst [vmem:[#allocation2 + $0x1d0] sm:$0xff] 0.0
          %319 = vst [vmem:[#allocation2 + $0x1d8] sm:$0xff] 0.0
          %320 = vst [vmem:[#allocation2 + $0x1e0] sm:$0xff] 0.0
          %321 = vst [vmem:[#allocation2 + $0x1e8] sm:$0xff] 0.0
          %322 = vst [vmem:[#allocation2 + $0x1f0] sm:$0xff] 0.0
          %323 = vst [vmem:[#allocation2 + $0x1f8] sm:$0xff] 0.0
        $region44: #{tpu_custom_call.1} parent=31 // pred_fallthru
          _
        %v324 = vld [vmem:[#allocation3] sm:$0xff]
        %v325 = vld [vmem:[#allocation3 + $0x8] sm:$0xff]
        %v326 = vld [vmem:[#allocation3 + $0x10] sm:$0xff]
        %v327 = vld [vmem:[#allocation3 + $0x18] sm:$0xff]
        %v328 = vld [vmem:[#allocation3 + $0x20] sm:$0xff]
        %v329 = vld [vmem:[#allocation3 + $0x28] sm:$0xff]
        %v330 = vld [vmem:[#allocation3 + $0x30] sm:$0xff]
        %v331 = vld [vmem:[#allocation3 + $0x38] sm:$0xff]
        %v332 = vld [vmem:[#allocation3 + $0x40] sm:$0xff]
        %v333 = vld [vmem:[#allocation3 + $0x48] sm:$0xff]
        %v334 = vld [vmem:[#allocation3 + $0x50] sm:$0xff]
        %v335 = vld [vmem:[#allocation3 + $0x58] sm:$0xff]
        %v336 = vld [vmem:[#allocation3 + $0x60] sm:$0xff]
        %v337 = vld [vmem:[#allocation3 + $0x68] sm:$0xff]
        %v338 = vld [vmem:[#allocation3 + $0x70] sm:$0xff]
        %v339 = vld [vmem:[#allocation3 + $0x78] sm:$0xff]
        %v340 = vld [vmem:[#allocation3 + $0x80] sm:$0xff]
        %v341 = vld [vmem:[#allocation3 + $0x88] sm:$0xff]
        %v342 = vld [vmem:[#allocation3 + $0x90] sm:$0xff]
        %v343 = vld [vmem:[#allocation3 + $0x98] sm:$0xff]
        %v344 = vld [vmem:[#allocation3 + $0xa0] sm:$0xff]
        %v345 = vld [vmem:[#allocation3 + $0xa8] sm:$0xff]
        %v346 = vld [vmem:[#allocation3 + $0xb0] sm:$0xff]
        %v347 = vld [vmem:[#allocation3 + $0xb8] sm:$0xff]
        %v348 = vld [vmem:[#allocation3 + $0xc0] sm:$0xff]
        %v349 = vld [vmem:[#allocation3 + $0xc8] sm:$0xff]
        %v350 = vld [vmem:[#allocation3 + $0xd0] sm:$0xff]
        %v351 = vld [vmem:[#allocation3 + $0xd8] sm:$0xff]
        %v352 = vld [vmem:[#allocation3 + $0xe0] sm:$0xff]
        %v353 = vld [vmem:[#allocation3 + $0xe8] sm:$0xff]
        %v354 = vld [vmem:[#allocation3 + $0xf0] sm:$0xff]
        %v355 = vld [vmem:[#allocation3 + $0xf8] sm:$0xff]
        %v356 = vld [vmem:[#allocation3 + $0x100] sm:$0xff]
        %v357 = vld [vmem:[#allocation3 + $0x108] sm:$0xff]
        %v358 = vld [vmem:[#allocation3 + $0x110] sm:$0xff]
        %v359 = vld [vmem:[#allocation3 + $0x118] sm:$0xff]
        %v360 = vld [vmem:[#allocation3 + $0x120] sm:$0xff]
        %v361 = vld [vmem:[#allocation3 + $0x128] sm:$0xff]
        %v362 = vld [vmem:[#allocation3 + $0x130] sm:$0xff]
        %v363 = vld [vmem:[#allocation3 + $0x138] sm:$0xff]
        %v364 = vld [vmem:[#allocation3 + $0x140] sm:$0xff]
        %v365 = vld [vmem:[#allocation3 + $0x148] sm:$0xff]
        %v366 = vld [vmem:[#allocation3 + $0x150] sm:$0xff]
        %v367 = vld [vmem:[#allocation3 + $0x158] sm:$0xff]
        %v368 = vld [vmem:[#allocation3 + $0x160] sm:$0xff]
        %v369 = vld [vmem:[#allocation3 + $0x168] sm:$0xff]
        %v370 = vld [vmem:[#allocation3 + $0x170] sm:$0xff]
        %v371 = vld [vmem:[#allocation3 + $0x178] sm:$0xff]
        %v372 = vld [vmem:[#allocation3 + $0x180] sm:$0xff]
        %v373 = vld [vmem:[#allocation3 + $0x188] sm:$0xff]
        %v374 = vld [vmem:[#allocation3 + $0x190] sm:$0xff]
        %v375 = vld [vmem:[#allocation3 + $0x198] sm:$0xff]
        %v376 = vld [vmem:[#allocation3 + $0x1a0] sm:$0xff]
        %v377 = vld [vmem:[#allocation3 + $0x1a8] sm:$0xff]
        %v378 = vld [vmem:[#allocation3 + $0x1b0] sm:$0xff]
        %v379 = vld [vmem:[#allocation3 + $0x1b8] sm:$0xff]
        %v380 = vld [vmem:[#allocation3 + $0x1c0] sm:$0xff]
        %v381 = vld [vmem:[#allocation3 + $0x1c8] sm:$0xff]
        %v382 = vld [vmem:[#allocation3 + $0x1d0] sm:$0xff]
        %v383 = vld [vmem:[#allocation3 + $0x1d8] sm:$0xff]
        %v384 = vld [vmem:[#allocation3 + $0x1e0] sm:$0xff]
        %v385 = vld [vmem:[#allocation3 + $0x1e8] sm:$0xff]
        %v386 = vld [vmem:[#allocation3 + $0x1f0] sm:$0xff]
        %v387 = vld [vmem:[#allocation3 + $0x1f8] sm:$0xff]
        %v388 = vld [vmem:[%s224] sm:$0xff]
        %v389 = vld [vmem:[%s224 + $0x8] sm:$0xff]
        %v390 = vld [vmem:[%s224 + $0x10] sm:$0xff]
        %v391 = vld [vmem:[%s224 + $0x18] sm:$0xff]
        %v392 = vld [vmem:[%s224 + $0x20] sm:$0xff]
        %v393 = vld [vmem:[%s224 + $0x28] sm:$0xff]
        %v394 = vld [vmem:[%s224 + $0x30] sm:$0xff]
        %v395 = vld [vmem:[%s224 + $0x38] sm:$0xff]
        %v396 = vld [vmem:[%s224 + $0x40] sm:$0xff]
        %v397 = vld [vmem:[%s224 + $0x48] sm:$0xff]
        %v398 = vld [vmem:[%s224 + $0x50] sm:$0xff]
        %v399 = vld [vmem:[%s224 + $0x58] sm:$0xff]
        %v400 = vld [vmem:[%s224 + $0x60] sm:$0xff]
        %v401 = vld [vmem:[%s224 + $0x68] sm:$0xff]
        %v402 = vld [vmem:[%s224 + $0x70] sm:$0xff]
        %v403 = vld [vmem:[%s224 + $0x78] sm:$0xff]
        %v404 = vld [vmem:[#allocation2] sm:$0xff]
        %v405 = vld [vmem:[#allocation2 + $0x8] sm:$0xff]
        %v406 = vld [vmem:[#allocation2 + $0x10] sm:$0xff]
        %v407 = vld [vmem:[#allocation2 + $0x18] sm:$0xff]
        %v408 = vld [vmem:[#allocation2 + $0x20] sm:$0xff]
        %v409 = vld [vmem:[#allocation2 + $0x28] sm:$0xff]
        %v410 = vld [vmem:[#allocation2 + $0x30] sm:$0xff]
        %v411 = vld [vmem:[#allocation2 + $0x38] sm:$0xff]
        %v412 = vld [vmem:[#allocation2 + $0x40] sm:$0xff]
        %v413 = vld [vmem:[#allocation2 + $0x48] sm:$0xff]
        %v414 = vld [vmem:[#allocation2 + $0x50] sm:$0xff]
        %v415 = vld [vmem:[#allocation2 + $0x58] sm:$0xff]
        %v416 = vld [vmem:[#allocation2 + $0x60] sm:$0xff]
        %v417 = vld [vmem:[#allocation2 + $0x68] sm:$0xff]
        %v418 = vld [vmem:[#allocation2 + $0x70] sm:$0xff]
        %v419 = vld [vmem:[#allocation2 + $0x78] sm:$0xff]
        %v420 = vld [vmem:[#allocation2 + $0x80] sm:$0xff]
        %v421 = vld [vmem:[#allocation2 + $0x88] sm:$0xff]
        %v422 = vld [vmem:[#allocation2 + $0x90] sm:$0xff]
        %v423 = vld [vmem:[#allocation2 + $0x98] sm:$0xff]
        %v424 = vld [vmem:[#allocation2 + $0xa0] sm:$0xff]
        %v425 = vld [vmem:[#allocation2 + $0xa8] sm:$0xff]
        %v426 = vld [vmem:[#allocation2 + $0xb0] sm:$0xff]
        %v427 = vld [vmem:[#allocation2 + $0xb8] sm:$0xff]
        %v428 = vld [vmem:[#allocation2 + $0xc0] sm:$0xff]
        %v429 = vld [vmem:[#allocation2 + $0xc8] sm:$0xff]
        %v430 = vld [vmem:[#allocation2 + $0xd0] sm:$0xff]
        %v431 = vld [vmem:[#allocation2 + $0xd8] sm:$0xff]
        %v432 = vld [vmem:[#allocation2 + $0xe0] sm:$0xff]
        %v433 = vld [vmem:[#allocation2 + $0xe8] sm:$0xff]
        %v434 = vld [vmem:[#allocation2 + $0xf0] sm:$0xff]
        %v435 = vld [vmem:[#allocation2 + $0xf8] sm:$0xff]
        %v436 = vld [vmem:[#allocation2 + $0x100] sm:$0xff]
        %v437 = vld [vmem:[#allocation2 + $0x108] sm:$0xff]
        %v438 = vld [vmem:[#allocation2 + $0x110] sm:$0xff]
        %v439 = vld [vmem:[#allocation2 + $0x118] sm:$0xff]
        %v440 = vld [vmem:[#allocation2 + $0x120] sm:$0xff]
        %v441 = vld [vmem:[#allocation2 + $0x128] sm:$0xff]
        %v442 = vld [vmem:[#allocation2 + $0x130] sm:$0xff]
        %v443 = vld [vmem:[#allocation2 + $0x138] sm:$0xff]
        %v444 = vld [vmem:[#allocation2 + $0x140] sm:$0xff]
        %v445 = vld [vmem:[#allocation2 + $0x148] sm:$0xff]
        %v446 = vld [vmem:[#allocation2 + $0x150] sm:$0xff]
        %v447 = vld [vmem:[#allocation2 + $0x158] sm:$0xff]
        %v448 = vld [vmem:[#allocation2 + $0x160] sm:$0xff]
        %v449 = vld [vmem:[#allocation2 + $0x168] sm:$0xff]
        %v450 = vld [vmem:[#allocation2 + $0x170] sm:$0xff]
        %v451 = vld [vmem:[#allocation2 + $0x178] sm:$0xff]
        %v452 = vld [vmem:[#allocation2 + $0x180] sm:$0xff]
        %v453 = vld [vmem:[#allocation2 + $0x188] sm:$0xff]
        %v454 = vld [vmem:[#allocation2 + $0x190] sm:$0xff]
        %v455 = vld [vmem:[#allocation2 + $0x198] sm:$0xff]
        %v456 = vld [vmem:[#allocation2 + $0x1a0] sm:$0xff]
        %v457 = vld [vmem:[#allocation2 + $0x1a8] sm:$0xff]
        %v458 = vld [vmem:[#allocation2 + $0x1b0] sm:$0xff]
        %v459 = vld [vmem:[#allocation2 + $0x1b8] sm:$0xff]
        %v460 = vld [vmem:[#allocation2 + $0x1c0] sm:$0xff]
        %v461 = vld [vmem:[#allocation2 + $0x1c8] sm:$0xff]
        %v462 = vld [vmem:[#allocation2 + $0x1d0] sm:$0xff]
        %v463 = vld [vmem:[#allocation2 + $0x1d8] sm:$0xff]
        %v464 = vld [vmem:[#allocation2 + $0x1e0] sm:$0xff]
        %v465 = vld [vmem:[#allocation2 + $0x1e8] sm:$0xff]
        %v466 = vld [vmem:[#allocation2 + $0x1f0] sm:$0xff]
        %v467 = vld [vmem:[#allocation2 + $0x1f8] sm:$0xff]
        %468 = vmatprep.subr.mxu0 0.0
        %469 = vmatpush1.xpose.msra.mxu0 %v388
        %470 = vmatprep.subr.mxu0 0.0
        %471 = vmatpush1.xpose.msra.mxu0 %v389
        %472 = vmatprep.subr.mxu0 0.0
        %473 = vmatpush1.xpose.msra.mxu0 %v390
        %474 = vmatprep.subr.mxu0 0.0
        %475 = vmatpush1.xpose.msra.mxu0 %v391
        %476 = vmatprep.subr.mxu0 0.0
        %477 = vmatpush1.xpose.msra.mxu0 %v392
        %478 = vmatprep.subr.mxu0 0.0
        %479 = vmatpush1.xpose.msra.mxu0 %v393
        %480 = vmatprep.subr.mxu0 0.0
        %481 = vmatpush1.xpose.msra.mxu0 %v394
        %482 = vmatprep.subr.mxu0 0.0
        %483 = vmatpush1.xpose.msra.mxu0 %v395
        %484 = vmatprep.subr.mxu0 0.0
        %485 = vmatpush1.xpose.msra.mxu0 %v396
        %486 = vmatprep.subr.mxu0 0.0
        %487 = vmatpush1.xpose.msra.mxu0 %v397
        %488 = vmatprep.subr.mxu0 0.0
        %489 = vmatpush1.xpose.msra.mxu0 %v398
        %490 = vmatprep.subr.mxu0 0.0
        %491 = vmatpush1.xpose.msra.mxu0 %v399
        %492 = vmatprep.subr.mxu0 0.0
        %493 = vmatpush1.xpose.msra.mxu0 %v400
        %494 = vmatprep.subr.mxu0 0.0
        %495 = vmatpush1.xpose.msra.mxu0 %v401
        %496 = vmatprep.subr.mxu0 0.0
        %497 = vmatpush1.xpose.msra.mxu0 %v402
        %498 = vmatprep.subr.mxu0 0.0
        %499 = vmatpush1.xpose.msra.mxu0 %v403
        %500 = vmatprep.subr.mxu0 0.0
        %501 = vmatpush1.xpose.msra.mxu0 0.0
        %502 = vmatprep.subr.mxu0 0.0
        %503 = vmatpush1.xpose.msra.mxu0 0.0
        %504 = vmatprep.subr.mxu0 0.0
        %505 = vmatpush1.xpose.msra.mxu0 0.0
        %506 = vmatprep.subr.mxu0 0.0
        %507 = vmatpush1.xpose.msra.mxu0 0.0
        %508 = vmatprep.subr.mxu0 0.0
        %509 = vmatpush1.xpose.msra.mxu0 0.0
        %510 = vmatprep.subr.mxu0 0.0
        %511 = vmatpush1.xpose.msra.mxu0 0.0
        %512 = vmatprep.subr.mxu0 0.0
        %513 = vmatpush1.xpose.msra.mxu0 0.0
        %514 = vmatprep.subr.mxu0 0.0
        %515 = vmatpush1.xpose.msra.mxu0 0.0
        %516 = vmatprep.subr.mxu0 0.0
        %517 = vmatpush1.xpose.msra.mxu0 0.0
        %518 = vmatprep.subr.mxu0 0.0
        %519 = vmatpush1.xpose.msra.mxu0 0.0
        %520 = vmatprep.subr.mxu0 0.0
        %521 = vmatpush1.xpose.msra.mxu0 0.0
        %522 = vmatprep.subr.mxu0 0.0
        %523 = vmatpush1.xpose.msra.mxu0 0.0
        %524 = vmatprep.subr.mxu0 0.0
        %525 = vmatpush1.xpose.msra.mxu0 0.0
        %526 = vmatprep.subr.mxu0 0.0
        %527 = vmatpush1.xpose.msra.mxu0 0.0
        %528 = vmatprep.subr.mxu0 0.0
        %529 = vmatpush1.xpose.msra.mxu0 0.0
        %530 = vmatprep.subr.mxu0 0.0
        %531 = vmatpush1.xpose.msra.mxu0 0.0
        %532 = vmatprep.mubr.f32.mxu0 0.0
        %533 = vmatmul.mubr.f32.gmra.mrb[0].mxu0 %v324
        %v534 = vpop.f32.mrb[0].mxu0
        %v535 = vadd.f32 0.0, %v534
        %v536 = vpop.f32.mrb[0].mxu0
        %537 = vmatprep.mubr.f32.mxu0 0.0
        %538 = vmatmul.mubr.f32.gmra.mrb[0].mxu0 %v325
        %v539 = vpop.f32.mrb[0].mxu0
        %v540 = vadd.f32 0.0, %v539
        %v541 = vpop.f32.mrb[0].mxu0
        %542 = vmatprep.mubr.f32.mxu0 0.0
        %543 = vmatmul.mubr.f32.gmra.mrb[0].mxu0 %v326
        %v544 = vpop.f32.mrb[0].mxu0
        %v545 = vadd.f32 0.0, %v544
        %v546 = vpop.f32.mrb[0].mxu0
        %547 = vmatprep.mubr.f32.mxu0 0.0
        %548 = vmatmul.mubr.f32.gmra.mrb[0].mxu0 %v327
        %v549 = vpop.f32.mrb[0].mxu0
        %v550 = vadd.f32 0.0, %v549
        %v551 = vpop.f32.mrb[0].mxu0
        %552 = vmatprep.mubr.f32.mxu0 0.0
        %553 = vmatmul.mubr.f32.gmra.mrb[0].mxu0 %v328
        %v554 = vpop.f32.mrb[0].mxu0
        %v555 = vadd.f32 0.0, %v554
        %v556 = vpop.f32.mrb[0].mxu0
        %557 = vmatprep.mubr.f32.mxu0 0.0
        %558 = vmatmul.mubr.f32.gmra.mrb[0].mxu0 %v329
        %v559 = vpop.f32.mrb[0].mxu0
        %v560 = vadd.f32 0.0, %v559
        %v561 = vpop.f32.mrb[0].mxu0
        %562 = vmatprep.mubr.f32.mxu0 0.0
        %563 = vmatmul.mubr.f32.gmra.mrb[0].mxu0 %v330
        %v564 = vpop.f32.mrb[0].mxu0
        %v565 = vadd.f32 0.0, %v564
        %v566 = vpop.f32.mrb[0].mxu0
        %567 = vmatprep.mubr.f32.mxu0 0.0
        %568 = vmatmul.mubr.f32.gmra.mrb[0].mxu0 %v331
        %v569 = vpop.f32.mrb[0].mxu0
        %v570 = vadd.f32 0.0, %v569
        %v571 = vpop.f32.mrb[0].mxu0
        %572 = vmatprep.mubr.f32.mxu0 0.0
        %573 = vmatmul.mubr.f32.gmra.mrb[0].mxu0 %v332
        %v574 = vpop.f32.mrb[0].mxu0
        %v575 = vadd.f32 0.0, %v574
        %v576 = vpop.f32.mrb[0].mxu0
        %577 = vmatprep.mubr.f32.mxu0 0.0
        %578 = vmatmul.mubr.f32.gmra.mrb[0].mxu0 %v333
        %v579 = vpop.f32.mrb[0].mxu0
        %v580 = vadd.f32 0.0, %v579
        %v581 = vpop.f32.mrb[0].mxu0
        %582 = vmatprep.mubr.f32.mxu0 0.0
        %583 = vmatmul.mubr.f32.gmra.mrb[0].mxu0 %v334
        %v584 = vpop.f32.mrb[0].mxu0
        %v585 = vadd.f32 0.0, %v584
        %v586 = vpop.f32.mrb[0].mxu0
        %587 = vmatprep.mubr.f32.mxu0 0.0
        %588 = vmatmul.mubr.f32.gmra.mrb[0].mxu0 %v335
        %v589 = vpop.f32.mrb[0].mxu0
        %v590 = vadd.f32 0.0, %v589
        %v591 = vpop.f32.mrb[0].mxu0
        %592 = vmatprep.mubr.f32.mxu0 0.0
        %593 = vmatmul.mubr.f32.gmra.mrb[0].mxu0 %v336
        %v594 = vpop.f32.mrb[0].mxu0
        %v595 = vadd.f32 0.0, %v594
        %v596 = vpop.f32.mrb[0].mxu0
        %597 = vmatprep.mubr.f32.mxu0 0.0
        %598 = vmatmul.mubr.f32.gmra.mrb[0].mxu0 %v337
        %v599 = vpop.f32.mrb[0].mxu0
        %v600 = vadd.f32 0.0, %v599
        %v601 = vpop.f32.mrb[0].mxu0
        %602 = vmatprep.mubr.f32.mxu0 0.0
        %603 = vmatmul.mubr.f32.gmra.mrb[0].mxu0 %v338
        %v604 = vpop.f32.mrb[0].mxu0
        %v605 = vadd.f32 0.0, %v604
        %v606 = vpop.f32.mrb[0].mxu0
        %607 = vmatprep.mubr.f32.mxu0 0.0
        %608 = vmatmul.mubr.f32.gmra.mrb[0].mxu0 %v339
        %v609 = vpop.f32.mrb[0].mxu0
        %v610 = vadd.f32 0.0, %v609
        %v611 = vpop.f32.mrb[0].mxu0
        %612 = vmatprep.mubr.f32.mxu0 0.0
        %613 = vmatmul.mubr.f32.gmra.mrb[0].mxu0 %v340
        %v614 = vpop.f32.mrb[0].mxu0
        %v615 = vadd.f32 0.0, %v614
        %v616 = vpop.f32.mrb[0].mxu0
        %617 = vmatprep.mubr.f32.mxu0 0.0
        %618 = vmatmul.mubr.f32.gmra.mrb[0].mxu0 %v341
        %v619 = vpop.f32.mrb[0].mxu0
        %v620 = vadd.f32 0.0, %v619
        %v621 = vpop.f32.mrb[0].mxu0
        %622 = vmatprep.mubr.f32.mxu0 0.0
        %623 = vmatmul.mubr.f32.gmra.mrb[0].mxu0 %v342
        %v624 = vpop.f32.mrb[0].mxu0
        %v625 = vadd.f32 0.0, %v624
        %v626 = vpop.f32.mrb[0].mxu0
        %627 = vmatprep.mubr.f32.mxu0 0.0
        %628 = vmatmul.mubr.f32.gmra.mrb[0].mxu0 %v343
        %v629 = vpop.f32.mrb[0].mxu0
        %v630 = vadd.f32 0.0, %v629
        %v631 = vpop.f32.mrb[0].mxu0
        %632 = vmatprep.mubr.f32.mxu0 0.0
        %633 = vmatmul.mubr.f32.gmra.mrb[0].mxu0 %v344
        %v634 = vpop.f32.mrb[0].mxu0
        %v635 = vadd.f32 0.0, %v634
        %v636 = vpop.f32.mrb[0].mxu0
        %637 = vmatprep.mubr.f32.mxu0 0.0
        %638 = vmatmul.mubr.f32.gmra.mrb[0].mxu0 %v345
        %v639 = vpop.f32.mrb[0].mxu0
        %v640 = vadd.f32 0.0, %v639
        %v641 = vpop.f32.mrb[0].mxu0
        %642 = vmatprep.mubr.f32.mxu0 0.0
        %643 = vmatmul.mubr.f32.gmra.mrb[0].mxu0 %v346
        %v644 = vpop.f32.mrb[0].mxu0
        %v645 = vadd.f32 0.0, %v644
        %v646 = vpop.f32.mrb[0].mxu0
        %647 = vmatprep.mubr.f32.mxu0 0.0
        %648 = vmatmul.mubr.f32.gmra.mrb[0].mxu0 %v347
        %v649 = vpop.f32.mrb[0].mxu0
        %v650 = vadd.f32 0.0, %v649
        %v651 = vpop.f32.mrb[0].mxu0
        %652 = vmatprep.mubr.f32.mxu0 0.0
        %653 = vmatmul.mubr.f32.gmra.mrb[0].mxu0 %v348
        %v654 = vpop.f32.mrb[0].mxu0
        %v655 = vadd.f32 0.0, %v654
        %v656 = vpop.f32.mrb[0].mxu0
        %657 = vmatprep.mubr.f32.mxu0 0.0
        %658 = vmatmul.mubr.f32.gmra.mrb[0].mxu0 %v349
        %v659 = vpop.f32.mrb[0].mxu0
        %v660 = vadd.f32 0.0, %v659
        %v661 = vpop.f32.mrb[0].mxu0
        %662 = vmatprep.mubr.f32.mxu0 0.0
        %663 = vmatmul.mubr.f32.gmra.mrb[0].mxu0 %v350
        %v664 = vpop.f32.mrb[0].mxu0
        %v665 = vadd.f32 0.0, %v664
        %v666 = vpop.f32.mrb[0].mxu0
        %667 = vmatprep.mubr.f32.mxu0 0.0
        %668 = vmatmul.mubr.f32.gmra.mrb[0].mxu0 %v351
        %v669 = vpop.f32.mrb[0].mxu0
        %v670 = vadd.f32 0.0, %v669
        %v671 = vpop.f32.mrb[0].mxu0
        %672 = vmatprep.mubr.f32.mxu0 0.0
        %673 = vmatmul.mubr.f32.gmra.mrb[0].mxu0 %v352
        %v674 = vpop.f32.mrb[0].mxu0
        %v675 = vadd.f32 0.0, %v674
        %v676 = vpop.f32.mrb[0].mxu0
        %677 = vmatprep.mubr.f32.mxu0 0.0
        %678 = vmatmul.mubr.f32.gmra.mrb[0].mxu0 %v353
        %v679 = vpop.f32.mrb[0].mxu0
        %v680 = vadd.f32 0.0, %v679
        %v681 = vpop.f32.mrb[0].mxu0
        %682 = vmatprep.mubr.f32.mxu0 0.0
        %683 = vmatmul.mubr.f32.gmra.mrb[0].mxu0 %v354
        %v684 = vpop.f32.mrb[0].mxu0
        %v685 = vadd.f32 0.0, %v684
        %v686 = vpop.f32.mrb[0].mxu0
        %687 = vmatprep.mubr.f32.mxu0 0.0
        %688 = vmatmul.mubr.f32.gmra.mrb[0].mxu0 %v355
        %v689 = vpop.f32.mrb[0].mxu0
        %v690 = vadd.f32 0.0, %v689
        %v691 = vpop.f32.mrb[0].mxu0
        %692 = vmatprep.mubr.f32.mxu0 0.0
        %693 = vmatmul.mubr.f32.gmra.mrb[0].mxu0 %v356
        %v694 = vpop.f32.mrb[0].mxu0
        %v695 = vadd.f32 0.0, %v694
        %v696 = vpop.f32.mrb[0].mxu0
        %697 = vmatprep.mubr.f32.mxu0 0.0
        %698 = vmatmul.mubr.f32.gmra.mrb[0].mxu0 %v357
        %v699 = vpop.f32.mrb[0].mxu0
        %v700 = vadd.f32 0.0, %v699
        %v701 = vpop.f32.mrb[0].mxu0
        %702 = vmatprep.mubr.f32.mxu0 0.0
        %703 = vmatmul.mubr.f32.gmra.mrb[0].mxu0 %v358
        %v704 = vpop.f32.mrb[0].mxu0
        %v705 = vadd.f32 0.0, %v704
        %v706 = vpop.f32.mrb[0].mxu0
        %707 = vmatprep.mubr.f32.mxu0 0.0
        %708 = vmatmul.mubr.f32.gmra.mrb[0].mxu0 %v359
        %v709 = vpop.f32.mrb[0].mxu0
        %v710 = vadd.f32 0.0, %v709
        %v711 = vpop.f32.mrb[0].mxu0
        %712 = vmatprep.mubr.f32.mxu0 0.0
        %713 = vmatmul.mubr.f32.gmra.mrb[0].mxu0 %v360
        %v714 = vpop.f32.mrb[0].mxu0
        %v715 = vadd.f32 0.0, %v714
        %v716 = vpop.f32.mrb[0].mxu0
        %717 = vmatprep.mubr.f32.mxu0 0.0
        %718 = vmatmul.mubr.f32.gmra.mrb[0].mxu0 %v361
        %v719 = vpop.f32.mrb[0].mxu0
        %v720 = vadd.f32 0.0, %v719
        %v721 = vpop.f32.mrb[0].mxu0
        %722 = vmatprep.mubr.f32.mxu0 0.0
        %723 = vmatmul.mubr.f32.gmra.mrb[0].mxu0 %v362
        %v724 = vpop.f32.mrb[0].mxu0
        %v725 = vadd.f32 0.0, %v724
        %v726 = vpop.f32.mrb[0].mxu0
        %727 = vmatprep.mubr.f32.mxu0 0.0
        %728 = vmatmul.mubr.f32.gmra.mrb[0].mxu0 %v363
        %v729 = vpop.f32.mrb[0].mxu0
        %v730 = vadd.f32 0.0, %v729
        %v731 = vpop.f32.mrb[0].mxu0
        %732 = vmatprep.mubr.f32.mxu0 0.0
        %733 = vmatmul.mubr.f32.gmra.mrb[0].mxu0 %v364
        %v734 = vpop.f32.mrb[0].mxu0
        %v735 = vadd.f32 0.0, %v734
        %v736 = vpop.f32.mrb[0].mxu0
        %737 = vmatprep.mubr.f32.mxu0 0.0
        %738 = vmatmul.mubr.f32.gmra.mrb[0].mxu0 %v365
        %v739 = vpop.f32.mrb[0].mxu0
        %v740 = vadd.f32 0.0, %v739
        %v741 = vpop.f32.mrb[0].mxu0
        %742 = vmatprep.mubr.f32.mxu0 0.0
        %743 = vmatmul.mubr.f32.gmra.mrb[0].mxu0 %v366
        %v744 = vpop.f32.mrb[0].mxu0
        %v745 = vadd.f32 0.0, %v744
        %v746 = vpop.f32.mrb[0].mxu0
        %747 = vmatprep.mubr.f32.mxu0 0.0
        %748 = vmatmul.mubr.f32.gmra.mrb[0].mxu0 %v367
        %v749 = vpop.f32.mrb[0].mxu0
        %v750 = vadd.f32 0.0, %v749
        %v751 = vpop.f32.mrb[0].mxu0
        %752 = vmatprep.mubr.f32.mxu0 0.0
        %753 = vmatmul.mubr.f32.gmra.mrb[0].mxu0 %v368
        %v754 = vpop.f32.mrb[0].mxu0
        %v755 = vadd.f32 0.0, %v754
        %v756 = vpop.f32.mrb[0].mxu0
        %757 = vmatprep.mubr.f32.mxu0 0.0
        %758 = vmatmul.mubr.f32.gmra.mrb[0].mxu0 %v369
        %v759 = vpop.f32.mrb[0].mxu0
        %v760 = vadd.f32 0.0, %v759
        %v761 = vpop.f32.mrb[0].mxu0
        %762 = vmatprep.mubr.f32.mxu0 0.0
        %763 = vmatmul.mubr.f32.gmra.mrb[0].mxu0 %v370
        %v764 = vpop.f32.mrb[0].mxu0
        %v765 = vadd.f32 0.0, %v764
        %v766 = vpop.f32.mrb[0].mxu0
        %767 = vmatprep.mubr.f32.mxu0 0.0
        %768 = vmatmul.mubr.f32.gmra.mrb[0].mxu0 %v371
        %v769 = vpop.f32.mrb[0].mxu0
        %v770 = vadd.f32 0.0, %v769
        %v771 = vpop.f32.mrb[0].mxu0
        %772 = vmatprep.mubr.f32.mxu0 0.0
        %773 = vmatmul.mubr.f32.gmra.mrb[0].mxu0 %v372
        %v774 = vpop.f32.mrb[0].mxu0
        %v775 = vadd.f32 0.0, %v774
        %v776 = vpop.f32.mrb[0].mxu0
        %777 = vmatprep.mubr.f32.mxu0 0.0
        %778 = vmatmul.mubr.f32.gmra.mrb[0].mxu0 %v373
        %v779 = vpop.f32.mrb[0].mxu0
        %v780 = vadd.f32 0.0, %v779
        %v781 = vpop.f32.mrb[0].mxu0
        %782 = vmatprep.mubr.f32.mxu0 0.0
        %783 = vmatmul.mubr.f32.gmra.mrb[0].mxu0 %v374
        %v784 = vpop.f32.mrb[0].mxu0
        %v785 = vadd.f32 0.0, %v784
        %v786 = vpop.f32.mrb[0].mxu0
        %787 = vmatprep.mubr.f32.mxu0 0.0
        %788 = vmatmul.mubr.f32.gmra.mrb[0].mxu0 %v375
        %v789 = vpop.f32.mrb[0].mxu0
        %v790 = vadd.f32 0.0, %v789
        %v791 = vpop.f32.mrb[0].mxu0
        %792 = vmatprep.mubr.f32.mxu0 0.0
        %793 = vmatmul.mubr.f32.gmra.mrb[0].mxu0 %v376
        %v794 = vpop.f32.mrb[0].mxu0
        %v795 = vadd.f32 0.0, %v794
        %v796 = vpop.f32.mrb[0].mxu0
        %797 = vmatprep.mubr.f32.mxu0 0.0
        %798 = vmatmul.mubr.f32.gmra.mrb[0].mxu0 %v377
        %v799 = vpop.f32.mrb[0].mxu0
        %v800 = vadd.f32 0.0, %v799
        %v801 = vpop.f32.mrb[0].mxu0
        %802 = vmatprep.mubr.f32.mxu0 0.0
        %803 = vmatmul.mubr.f32.gmra.mrb[0].mxu0 %v378
        %v804 = vpop.f32.mrb[0].mxu0
        %v805 = vadd.f32 0.0, %v804
        %v806 = vpop.f32.mrb[0].mxu0
        %807 = vmatprep.mubr.f32.mxu0 0.0
        %808 = vmatmul.mubr.f32.gmra.mrb[0].mxu0 %v379
        %v809 = vpop.f32.mrb[0].mxu0
        %v810 = vadd.f32 0.0, %v809
        %v811 = vpop.f32.mrb[0].mxu0
        %812 = vmatprep.mubr.f32.mxu0 0.0
        %813 = vmatmul.mubr.f32.gmra.mrb[0].mxu0 %v380
        %v814 = vpop.f32.mrb[0].mxu0
        %v815 = vadd.f32 0.0, %v814
        %v816 = vpop.f32.mrb[0].mxu0
        %817 = vmatprep.mubr.f32.mxu0 0.0
        %818 = vmatmul.mubr.f32.gmra.mrb[0].mxu0 %v381
        %v819 = vpop.f32.mrb[0].mxu0
        %v820 = vadd.f32 0.0, %v819
        %v821 = vpop.f32.mrb[0].mxu0
        %822 = vmatprep.mubr.f32.mxu0 0.0
        %823 = vmatmul.mubr.f32.gmra.mrb[0].mxu0 %v382
        %v824 = vpop.f32.mrb[0].mxu0
        %v825 = vadd.f32 0.0, %v824
        %v826 = vpop.f32.mrb[0].mxu0
        %827 = vmatprep.mubr.f32.mxu0 0.0
        %828 = vmatmul.mubr.f32.gmra.mrb[0].mxu0 %v383
        %v829 = vpop.f32.mrb[0].mxu0
        %v830 = vadd.f32 0.0, %v829
        %v831 = vpop.f32.mrb[0].mxu0
        %832 = vmatprep.mubr.f32.mxu0 0.0
        %833 = vmatmul.mubr.f32.gmra.mrb[0].mxu0 %v384
        %v834 = vpop.f32.mrb[0].mxu0
        %v835 = vadd.f32 0.0, %v834
        %v836 = vpop.f32.mrb[0].mxu0
        %837 = vmatprep.mubr.f32.mxu0 0.0
        %838 = vmatmul.mubr.f32.gmra.mrb[0].mxu0 %v385
        %v839 = vpop.f32.mrb[0].mxu0
        %v840 = vadd.f32 0.0, %v839
        %v841 = vpop.f32.mrb[0].mxu0
        %842 = vmatprep.mubr.f32.mxu0 0.0
        %843 = vmatmul.mubr.f32.gmra.mrb[0].mxu0 %v386
        %v844 = vpop.f32.mrb[0].mxu0
        %v845 = vadd.f32 0.0, %v844
        %v846 = vpop.f32.mrb[0].mxu0
        %847 = vmatprep.mubr.f32.mxu0 0.0
        %848 = vmatmul.mubr.f32.gmra.mrb[0].mxu0 %v387
        %v849 = vpop.f32.mrb[0].mxu0
        %v850 = vadd.f32 0.0, %v849
        %v851 = vpop.f32.mrb[0].mxu0
        %852 = vdwg.mxu0
        %v853 = vadd.f32 %v404, %v535
        %v854 = vadd.f32 %v405, %v540
        %v855 = vadd.f32 %v406, %v545
        %v856 = vadd.f32 %v407, %v550
        %v857 = vadd.f32 %v408, %v555
        %v858 = vadd.f32 %v409, %v560
        %v859 = vadd.f32 %v410, %v565
        %v860 = vadd.f32 %v411, %v570
        %v861 = vadd.f32 %v412, %v575
        %v862 = vadd.f32 %v413, %v580
        %v863 = vadd.f32 %v414, %v585
        %v864 = vadd.f32 %v415, %v590
        %v865 = vadd.f32 %v416, %v595
        %v866 = vadd.f32 %v417, %v600
        %v867 = vadd.f32 %v418, %v605
        %v868 = vadd.f32 %v419, %v610
        %v869 = vadd.f32 %v420, %v615
        %v870 = vadd.f32 %v421, %v620
        %v871 = vadd.f32 %v422, %v625
        %v872 = vadd.f32 %v423, %v630
        %v873 = vadd.f32 %v424, %v635
        %v874 = vadd.f32 %v425, %v640
        %v875 = vadd.f32 %v426, %v645
        %v876 = vadd.f32 %v427, %v650
        %v877 = vadd.f32 %v428, %v655
        %v878 = vadd.f32 %v429, %v660
        %v879 = vadd.f32 %v430, %v665
        %v880 = vadd.f32 %v431, %v670
        %v881 = vadd.f32 %v432, %v675
        %v882 = vadd.f32 %v433, %v680
        %v883 = vadd.f32 %v434, %v685
        %v884 = vadd.f32 %v435, %v690
        %v885 = vadd.f32 %v436, %v695
        %v886 = vadd.f32 %v437, %v700
        %v887 = vadd.f32 %v438, %v705
        %v888 = vadd.f32 %v439, %v710
        %v889 = vadd.f32 %v440, %v715
        %v890 = vadd.f32 %v441, %v720
        %v891 = vadd.f32 %v442, %v725
        %v892 = vadd.f32 %v443, %v730
        %v893 = vadd.f32 %v444, %v735
        %v894 = vadd.f32 %v445, %v740
        %v895 = vadd.f32 %v446, %v745
        %v896 = vadd.f32 %v447, %v750
        %v897 = vadd.f32 %v448, %v755
        %v898 = vadd.f32 %v449, %v760
        %v899 = vadd.f32 %v450, %v765
        %v900 = vadd.f32 %v451, %v770
        %v901 = vadd.f32 %v452, %v775
        %v902 = vadd.f32 %v453, %v780
        %v903 = vadd.f32 %v454, %v785
        %v904 = vadd.f32 %v455, %v790
        %v905 = vadd.f32 %v456, %v795
        %v906 = vadd.f32 %v457, %v800
        %v907 = vadd.f32 %v458, %v805
        %v908 = vadd.f32 %v459, %v810
        %v909 = vadd.f32 %v460, %v815
        %v910 = vadd.f32 %v461, %v820
        %v911 = vadd.f32 %v462, %v825
        %v912 = vadd.f32 %v463, %v830
        %v913 = vadd.f32 %v464, %v835
        %v914 = vadd.f32 %v465, %v840
        %v915 = vadd.f32 %v466, %v845
        %v916 = vadd.f32 %v467, %v850
        %917 = vst [vmem:[#allocation2] sm:$0xff] %v853
        %918 = vst [vmem:[#allocation2 + $0x8] sm:$0xff] %v854
        %919 = vst [vmem:[#allocation2 + $0x10] sm:$0xff] %v855
        %920 = vst [vmem:[#allocation2 + $0x18] sm:$0xff] %v856
        %921 = vst [vmem:[#allocation2 + $0x20] sm:$0xff] %v857
        %922 = vst [vmem:[#allocation2 + $0x28] sm:$0xff] %v858
        %923 = vst [vmem:[#allocation2 + $0x30] sm:$0xff] %v859
        %924 = vst [vmem:[#allocation2 + $0x38] sm:$0xff] %v860
        %925 = vst [vmem:[#allocation2 + $0x40] sm:$0xff] %v861
        %926 = vst [vmem:[#allocation2 + $0x48] sm:$0xff] %v862
        %927 = vst [vmem:[#allocation2 + $0x50] sm:$0xff] %v863
        %928 = vst [vmem:[#allocation2 + $0x58] sm:$0xff] %v864
        %929 = vst [vmem:[#allocation2 + $0x60] sm:$0xff] %v865
        %930 = vst [vmem:[#allocation2 + $0x68] sm:$0xff] %v866
        %931 = vst [vmem:[#allocation2 + $0x70] sm:$0xff] %v867
        %932 = vst [vmem:[#allocation2 + $0x78] sm:$0xff] %v868
        %933 = vst [vmem:[#allocation2 + $0x80] sm:$0xff] %v869
        %934 = vst [vmem:[#allocation2 + $0x88] sm:$0xff] %v870
        %935 = vst [vmem:[#allocation2 + $0x90] sm:$0xff] %v871
        %936 = vst [vmem:[#allocation2 + $0x98] sm:$0xff] %v872
        %937 = vst [vmem:[#allocation2 + $0xa0] sm:$0xff] %v873
        %938 = vst [vmem:[#allocation2 + $0xa8] sm:$0xff] %v874
        %939 = vst [vmem:[#allocation2 + $0xb0] sm:$0xff] %v875
        %940 = vst [vmem:[#allocation2 + $0xb8] sm:$0xff] %v876
        %941 = vst [vmem:[#allocation2 + $0xc0] sm:$0xff] %v877
        %942 = vst [vmem:[#allocation2 + $0xc8] sm:$0xff] %v878
        %943 = vst [vmem:[#allocation2 + $0xd0] sm:$0xff] %v879
        %944 = vst [vmem:[#allocation2 + $0xd8] sm:$0xff] %v880
        %945 = vst [vmem:[#allocation2 + $0xe0] sm:$0xff] %v881
        %946 = vst [vmem:[#allocation2 + $0xe8] sm:$0xff] %v882
        %947 = vst [vmem:[#allocation2 + $0xf0] sm:$0xff] %v883
        %948 = vst [vmem:[#allocation2 + $0xf8] sm:$0xff] %v884
        %949 = vst [vmem:[#allocation2 + $0x100] sm:$0xff] %v885
        %950 = vst [vmem:[#allocation2 + $0x108] sm:$0xff] %v886
        %951 = vst [vmem:[#allocation2 + $0x110] sm:$0xff] %v887
        %952 = vst [vmem:[#allocation2 + $0x118] sm:$0xff] %v888
        %953 = vst [vmem:[#allocation2 + $0x120] sm:$0xff] %v889
        %954 = vst [vmem:[#allocation2 + $0x128] sm:$0xff] %v890
        %955 = vst [vmem:[#allocation2 + $0x130] sm:$0xff] %v891
        %956 = vst [vmem:[#allocation2 + $0x138] sm:$0xff] %v892
        %957 = vst [vmem:[#allocation2 + $0x140] sm:$0xff] %v893
        %958 = vst [vmem:[#allocation2 + $0x148] sm:$0xff] %v894
        %959 = vst [vmem:[#allocation2 + $0x150] sm:$0xff] %v895
        %960 = vst [vmem:[#allocation2 + $0x158] sm:$0xff] %v896
        %961 = vst [vmem:[#allocation2 + $0x160] sm:$0xff] %v897
        %962 = vst [vmem:[#allocation2 + $0x168] sm:$0xff] %v898
        %963 = vst [vmem:[#allocation2 + $0x170] sm:$0xff] %v899
        %964 = vst [vmem:[#allocation2 + $0x178] sm:$0xff] %v900
        %965 = vst [vmem:[#allocation2 + $0x180] sm:$0xff] %v901
        %966 = vst [vmem:[#allocation2 + $0x188] sm:$0xff] %v902
        %967 = vst [vmem:[#allocation2 + $0x190] sm:$0xff] %v903
        %968 = vst [vmem:[#allocation2 + $0x198] sm:$0xff] %v904
        %969 = vst [vmem:[#allocation2 + $0x1a0] sm:$0xff] %v905
        %970 = vst [vmem:[#allocation2 + $0x1a8] sm:$0xff] %v906
        %971 = vst [vmem:[#allocation2 + $0x1b0] sm:$0xff] %v907
        %972 = vst [vmem:[#allocation2 + $0x1b8] sm:$0xff] %v908
        %973 = vst [vmem:[#allocation2 + $0x1c0] sm:$0xff] %v909
        %974 = vst [vmem:[#allocation2 + $0x1c8] sm:$0xff] %v910
        %975 = vst [vmem:[#allocation2 + $0x1d0] sm:$0xff] %v911
        %976 = vst [vmem:[#allocation2 + $0x1d8] sm:$0xff] %v912
        %977 = vst [vmem:[#allocation2 + $0x1e0] sm:$0xff] %v913
        %978 = vst [vmem:[#allocation2 + $0x1e8] sm:$0xff] %v914
        %979 = vst [vmem:[#allocation2 + $0x1f0] sm:$0xff] %v915
        %980 = vst [vmem:[#allocation2 + $0x1f8] sm:$0xff] %v916
        // Predicated region
        $region45: #{tpu_custom_call.1} parent=31 // pred_check
          %p981 = pneg %p256
        $region46: #{tpu_custom_call.1} parent=31 // pred_check_branch
          %983 = sbr.rel (%p981) target = $region48
        $region47: #{tpu_custom_call.1} parent=31 // pred_region
          %v984 = vld [vmem:[#allocation2] sm:$0xff]
          %v985 = vld [vmem:[#allocation2 + $0x8] sm:$0xff]
          %v986 = vld [vmem:[#allocation2 + $0x10] sm:$0xff]
          %v987 = vld [vmem:[#allocation2 + $0x18] sm:$0xff]
          %v988 = vld [vmem:[#allocation2 + $0x20] sm:$0xff]
          %v989 = vld [vmem:[#allocation2 + $0x28] sm:$0xff]
          %v990 = vld [vmem:[#allocation2 + $0x30] sm:$0xff]
          %v991 = vld [vmem:[#allocation2 + $0x38] sm:$0xff]
          %v992 = vld [vmem:[#allocation2 + $0x40] sm:$0xff]
          %v993 = vld [vmem:[#allocation2 + $0x48] sm:$0xff]
          %v994 = vld [vmem:[#allocation2 + $0x50] sm:$0xff]
          %v995 = vld [vmem:[#allocation2 + $0x58] sm:$0xff]
          %v996 = vld [vmem:[#allocation2 + $0x60] sm:$0xff]
          %v997 = vld [vmem:[#allocation2 + $0x68] sm:$0xff]
          %v998 = vld [vmem:[#allocation2 + $0x70] sm:$0xff]
          %v999 = vld [vmem:[#allocation2 + $0x78] sm:$0xff]
          %v1000 = vld [vmem:[#allocation2 + $0x80] sm:$0xff]
          %v1001 = vld [vmem:[#allocation2 + $0x88] sm:$0xff]
          %v1002 = vld [vmem:[#allocation2 + $0x90] sm:$0xff]
          %v1003 = vld [vmem:[#allocation2 + $0x98] sm:$0xff]
          %v1004 = vld [vmem:[#allocation2 + $0xa0] sm:$0xff]
          %v1005 = vld [vmem:[#allocation2 + $0xa8] sm:$0xff]
          %v1006 = vld [vmem:[#allocation2 + $0xb0] sm:$0xff]
          %v1007 = vld [vmem:[#allocation2 + $0xb8] sm:$0xff]
          %v1008 = vld [vmem:[#allocation2 + $0xc0] sm:$0xff]
          %v1009 = vld [vmem:[#allocation2 + $0xc8] sm:$0xff]
          %v1010 = vld [vmem:[#allocation2 + $0xd0] sm:$0xff]
          %v1011 = vld [vmem:[#allocation2 + $0xd8] sm:$0xff]
          %v1012 = vld [vmem:[#allocation2 + $0xe0] sm:$0xff]
          %v1013 = vld [vmem:[#allocation2 + $0xe8] sm:$0xff]
          %v1014 = vld [vmem:[#allocation2 + $0xf0] sm:$0xff]
          %v1015 = vld [vmem:[#allocation2 + $0xf8] sm:$0xff]
          %v1016 = vld [vmem:[#allocation2 + $0x100] sm:$0xff]
          %v1017 = vld [vmem:[#allocation2 + $0x108] sm:$0xff]
          %v1018 = vld [vmem:[#allocation2 + $0x110] sm:$0xff]
          %v1019 = vld [vmem:[#allocation2 + $0x118] sm:$0xff]
          %v1020 = vld [vmem:[#allocation2 + $0x120] sm:$0xff]
          %v1021 = vld [vmem:[#allocation2 + $0x128] sm:$0xff]
          %v1022 = vld [vmem:[#allocation2 + $0x130] sm:$0xff]
          %v1023 = vld [vmem:[#allocation2 + $0x138] sm:$0xff]
          %v1024 = vld [vmem:[#allocation2 + $0x140] sm:$0xff]
          %v1025 = vld [vmem:[#allocation2 + $0x148] sm:$0xff]
          %v1026 = vld [vmem:[#allocation2 + $0x150] sm:$0xff]
          %v1027 = vld [vmem:[#allocation2 + $0x158] sm:$0xff]
          %v1028 = vld [vmem:[#allocation2 + $0x160] sm:$0xff]
          %v1029 = vld [vmem:[#allocation2 + $0x168] sm:$0xff]
          %v1030 = vld [vmem:[#allocation2 + $0x170] sm:$0xff]
          %v1031 = vld [vmem:[#allocation2 + $0x178] sm:$0xff]
          %v1032 = vld [vmem:[#allocation2 + $0x180] sm:$0xff]
          %v1033 = vld [vmem:[#allocation2 + $0x188] sm:$0xff]
          %v1034 = vld [vmem:[#allocation2 + $0x190] sm:$0xff]
          %v1035 = vld [vmem:[#allocation2 + $0x198] sm:$0xff]
          %v1036 = vld [vmem:[#allocation2 + $0x1a0] sm:$0xff]
          %v1037 = vld [vmem:[#allocation2 + $0x1a8] sm:$0xff]
          %v1038 = vld [vmem:[#allocation2 + $0x1b0] sm:$0xff]
          %v1039 = vld [vmem:[#allocation2 + $0x1b8] sm:$0xff]
          %v1040 = vld [vmem:[#allocation2 + $0x1c0] sm:$0xff]
          %v1041 = vld [vmem:[#allocation2 + $0x1c8] sm:$0xff]
          %v1042 = vld [vmem:[#allocation2 + $0x1d0] sm:$0xff]
          %v1043 = vld [vmem:[#allocation2 + $0x1d8] sm:$0xff]
          %v1044 = vld [vmem:[#allocation2 + $0x1e0] sm:$0xff]
          %v1045 = vld [vmem:[#allocation2 + $0x1e8] sm:$0xff]
          %v1046 = vld [vmem:[#allocation2 + $0x1f0] sm:$0xff]
          %v1047 = vld [vmem:[#allocation2 + $0x1f8] sm:$0xff]
          %v1048 = vld [vmem:[%s254] sm:$0x1]
          %v1050 = vlaneseq
          %v1051 = vshrl.u32 %v1050, 7
          %v1052 = vsub.s32 0, %v1051
          %v1053 = vrot.slane %v1048, %v1052
          %v1055 = vadd.f32 %v984, %v1053
          %v1056 = vadd.f32 %v985, %v1053
          %v1057 = vadd.f32 %v986, %v1053
          %v1058 = vadd.f32 %v987, %v1053
          %v1059 = vadd.f32 %v988, %v1053
          %v1060 = vadd.f32 %v989, %v1053
          %v1061 = vadd.f32 %v990, %v1053
          %v1062 = vadd.f32 %v991, %v1053
          %v1063 = vadd.f32 %v992, %v1053
          %v1064 = vadd.f32 %v993, %v1053
          %v1065 = vadd.f32 %v994, %v1053
          %v1066 = vadd.f32 %v995, %v1053
          %v1067 = vadd.f32 %v996, %v1053
          %v1068 = vadd.f32 %v997, %v1053
          %v1069 = vadd.f32 %v998, %v1053
          %v1070 = vadd.f32 %v999, %v1053
          %v1071 = vadd.f32 %v1000, %v1053
          %v1072 = vadd.f32 %v1001, %v1053
          %v1073 = vadd.f32 %v1002, %v1053
          %v1074 = vadd.f32 %v1003, %v1053
          %v1075 = vadd.f32 %v1004, %v1053
          %v1076 = vadd.f32 %v1005, %v1053
          %v1077 = vadd.f32 %v1006, %v1053
          %v1078 = vadd.f32 %v1007, %v1053
          %v1079 = vadd.f32 %v1008, %v1053
          %v1080 = vadd.f32 %v1009, %v1053
          %v1081 = vadd.f32 %v1010, %v1053
          %v1082 = vadd.f32 %v1011, %v1053
          %v1083 = vadd.f32 %v1012, %v1053
          %v1084 = vadd.f32 %v1013, %v1053
          %v1085 = vadd.f32 %v1014, %v1053
          %v1086 = vadd.f32 %v1015, %v1053
          %v1087 = vadd.f32 %v1016, %v1053
          %v1088 = vadd.f32 %v1017, %v1053
          %v1089 = vadd.f32 %v1018, %v1053
          %v1090 = vadd.f32 %v1019, %v1053
          %v1091 = vadd.f32 %v1020, %v1053
          %v1092 = vadd.f32 %v1021, %v1053
          %v1093 = vadd.f32 %v1022, %v1053
          %v1094 = vadd.f32 %v1023, %v1053
          %v1095 = vadd.f32 %v1024, %v1053
          %v1096 = vadd.f32 %v1025, %v1053
          %v1097 = vadd.f32 %v1026, %v1053
          %v1098 = vadd.f32 %v1027, %v1053
          %v1099 = vadd.f32 %v1028, %v1053
          %v1100 = vadd.f32 %v1029, %v1053
          %v1101 = vadd.f32 %v1030, %v1053
          %v1102 = vadd.f32 %v1031, %v1053
          %v1103 = vadd.f32 %v1032, %v1053
          %v1104 = vadd.f32 %v1033, %v1053
          %v1105 = vadd.f32 %v1034, %v1053
          %v1106 = vadd.f32 %v1035, %v1053
          %v1107 = vadd.f32 %v1036, %v1053
          %v1108 = vadd.f32 %v1037, %v1053
          %v1109 = vadd.f32 %v1038, %v1053
          %v1110 = vadd.f32 %v1039, %v1053
          %v1111 = vadd.f32 %v1040, %v1053
          %v1112 = vadd.f32 %v1041, %v1053
          %v1113 = vadd.f32 %v1042, %v1053
          %v1114 = vadd.f32 %v1043, %v1053
          %v1115 = vadd.f32 %v1044, %v1053
          %v1116 = vadd.f32 %v1045, %v1053
          %v1117 = vadd.f32 %v1046, %v1053
          %v1118 = vadd.f32 %v1047, %v1053
          %1119 = vst [vmem:[%s249] sm:$0xff] %v1055
          %1120 = vst [vmem:[%s249 + $0x8] sm:$0xff] %v1056
          %1121 = vst [vmem:[%s249 + $0x10] sm:$0xff] %v1057
          %1122 = vst [vmem:[%s249 + $0x18] sm:$0xff] %v1058
          %1123 = vst [vmem:[%s249 + $0x20] sm:$0xff] %v1059
          %1124 = vst [vmem:[%s249 + $0x28] sm:$0xff] %v1060
          %1125 = vst [vmem:[%s249 + $0x30] sm:$0xff] %v1061
          %1126 = vst [vmem:[%s249 + $0x38] sm:$0xff] %v1062
          %1127 = vst [vmem:[%s249 + $0x40] sm:$0xff] %v1063
          %1128 = vst [vmem:[%s249 + $0x48] sm:$0xff] %v1064
          %1129 = vst [vmem:[%s249 + $0x50] sm:$0xff] %v1065
          %1130 = vst [vmem:[%s249 + $0x58] sm:$0xff] %v1066
          %1131 = vst [vmem:[%s249 + $0x60] sm:$0xff] %v1067
          %1132 = vst [vmem:[%s249 + $0x68] sm:$0xff] %v1068
          %1133 = vst [vmem:[%s249 + $0x70] sm:$0xff] %v1069
          %1134 = vst [vmem:[%s249 + $0x78] sm:$0xff] %v1070
          %1135 = vst [vmem:[%s249 + $0x80] sm:$0xff] %v1071
          %1136 = vst [vmem:[%s249 + $0x88] sm:$0xff] %v1072
          %1137 = vst [vmem:[%s249 + $0x90] sm:$0xff] %v1073
          %1138 = vst [vmem:[%s249 + $0x98] sm:$0xff] %v1074
          %1139 = vst [vmem:[%s249 + $0xa0] sm:$0xff] %v1075
          %1140 = vst [vmem:[%s249 + $0xa8] sm:$0xff] %v1076
          %1141 = vst [vmem:[%s249 + $0xb0] sm:$0xff] %v1077
          %1142 = vst [vmem:[%s249 + $0xb8] sm:$0xff] %v1078
          %1143 = vst [vmem:[%s249 + $0xc0] sm:$0xff] %v1079
          %1144 = vst [vmem:[%s249 + $0xc8] sm:$0xff] %v1080
          %1145 = vst [vmem:[%s249 + $0xd0] sm:$0xff] %v1081
          %1146 = vst [vmem:[%s249 + $0xd8] sm:$0xff] %v1082
          %1147 = vst [vmem:[%s249 + $0xe0] sm:$0xff] %v1083
          %1148 = vst [vmem:[%s249 + $0xe8] sm:$0xff] %v1084
          %1149 = vst [vmem:[%s249 + $0xf0] sm:$0xff] %v1085
          %1150 = vst [vmem:[%s249 + $0xf8] sm:$0xff] %v1086
          %1151 = vst [vmem:[%s249 + $0x100] sm:$0xff] %v1087
          %1152 = vst [vmem:[%s249 + $0x108] sm:$0xff] %v1088
          %1153 = vst [vmem:[%s249 + $0x110] sm:$0xff] %v1089
          %1154 = vst [vmem:[%s249 + $0x118] sm:$0xff] %v1090
          %1155 = vst [vmem:[%s249 + $0x120] sm:$0xff] %v1091
          %1156 = vst [vmem:[%s249 + $0x128] sm:$0xff] %v1092
          %1157 = vst [vmem:[%s249 + $0x130] sm:$0xff] %v1093
          %1158 = vst [vmem:[%s249 + $0x138] sm:$0xff] %v1094
          %1159 = vst [vmem:[%s249 + $0x140] sm:$0xff] %v1095
          %1160 = vst [vmem:[%s249 + $0x148] sm:$0xff] %v1096
          %1161 = vst [vmem:[%s249 + $0x150] sm:$0xff] %v1097
          %1162 = vst [vmem:[%s249 + $0x158] sm:$0xff] %v1098
          %1163 = vst [vmem:[%s249 + $0x160] sm:$0xff] %v1099
          %1164 = vst [vmem:[%s249 + $0x168] sm:$0xff] %v1100
          %1165 = vst [vmem:[%s249 + $0x170] sm:$0xff] %v1101
          %1166 = vst [vmem:[%s249 + $0x178] sm:$0xff] %v1102
          %1167 = vst [vmem:[%s249 + $0x180] sm:$0xff] %v1103
          %1168 = vst [vmem:[%s249 + $0x188] sm:$0xff] %v1104
          %1169 = vst [vmem:[%s249 + $0x190] sm:$0xff] %v1105
          %1170 = vst [vmem:[%s249 + $0x198] sm:$0xff] %v1106
          %1171 = vst [vmem:[%s249 + $0x1a0] sm:$0xff] %v1107
          %1172 = vst [vmem:[%s249 + $0x1a8] sm:$0xff] %v1108
          %1173 = vst [vmem:[%s249 + $0x1b0] sm:$0xff] %v1109
          %1174 = vst [vmem:[%s249 + $0x1b8] sm:$0xff] %v1110
          %1175 = vst [vmem:[%s249 + $0x1c0] sm:$0xff] %v1111
          %1176 = vst [vmem:[%s249 + $0x1c8] sm:$0xff] %v1112
          %1177 = vst [vmem:[%s249 + $0x1d0] sm:$0xff] %v1113
          %1178 = vst [vmem:[%s249 + $0x1d8] sm:$0xff] %v1114
          %1179 = vst [vmem:[%s249 + $0x1e0] sm:$0xff] %v1115
          %1180 = vst [vmem:[%s249 + $0x1e8] sm:$0xff] %v1116
          %1181 = vst [vmem:[%s249 + $0x1f0] sm:$0xff] %v1117
          %1182 = vst [vmem:[%s249 + $0x1f8] sm:$0xff] %v1118
        $region48: #{tpu_custom_call.1} parent=31 // pred_fallthru
          _
        %s1183 = sand.u32 %s132, 1
        %s1184 = scalar_lea.sflag [#allocation5], %s1183
        %s1185 = sand.u32 %s132, 1
        %s1186 = smul.addr %s1185, 512
        %s1187 = scalar_lea.vmem [#allocation8], %s1186
        // Predicated region
        $region49: #{tpu_custom_call.1} parent=31 // pred_check
          %p1188 = pneg %p142
        $region50: #{tpu_custom_call.1} parent=31 // pred_check_branch
          %1190 = sbr.rel (%p1188) target = $region52
        $region51: #{tpu_custom_call.1} parent=31 // pred_region
          %s1191 = smul.u32 64, %s26
          %s1193 = ssub.s32 8192, 8192
          %1194 = vsyncadd %s1184, %s1193
          %s1195 = smul.addr %s1191, 3
          %s1196 = sadd.s32 %s27, %s1195
          %s1197 = smul.addr %s1196, 128
          %s1198 = scalar_lea.hbm %s3, %s1197
          %s1199 = sshll.u32 %s1187, 4
          %s1200 = int_to_ptr.vmem [resolvable:$true] %s1199
          %1205 = dma.vmem_to_hbm [thread:$0]  %s1200, 8192, %s1198, %s1184, 128, 384, 8
        $region52: #{tpu_custom_call.1} parent=31 // pred_fallthru
          _
      $region32: #{tpu_custom_call.1} parent=5 // pred_fallthru
        _
      %p1206 = scmp.le.s32.totalorder 2, %s16
      // Predicated region
      $region53: #{tpu_custom_call.1} parent=5 // pred_check
        %p1207 = pneg %p1206
      $region54: #{tpu_custom_call.1} parent=5 // pred_check_branch
        %1209 = sbr.rel (%p1207) target = $region56
      $region55: #{tpu_custom_call.1} parent=5 // pred_region
        %s1210 = ssub.s32 %s16, 2
        // Predicated region
        $region57: #{tpu_custom_call.1} parent=55 // pred_check
          %p1211 = pneg %p148
        $region58: #{tpu_custom_call.1} parent=55 // pred_check_branch
          %1213 = sbr.rel (%p1211) target = $region60
        $region59: #{tpu_custom_call.1} parent=55 // pred_region
          %s1214 = sand.u32 %s133, 1
          %s1215 = scalar_lea.sflag [#allocation5], %s1214
          %s1216 = sand.u32 %s133, 1
          %s1217 = smul.addr %s1216, 512
          %s1218 = scalar_lea.vmem [#allocation8], %s1217
          %1219 = dma.done %s1215, 8192
        $region60: #{tpu_custom_call.1} parent=55 // pred_fallthru
          _
      $region56: #{tpu_custom_call.1} parent=5 // pred_fallthru
        _
    $region6: #{tpu_custom_call.1} parent=1 // loop_footer
      %s20 = sadd.s32 1, %s16
    $region7: #{tpu_custom_call.1} parent=1 // loop_footer_branch
      %15 = sbr.rel target = $region3
    $region8: #{tpu_custom_call.1} parent=1 // loop_exit
      _
    %1220 = vsyncpa [#allocation4], 1
    %s1221 = scalar_lea.sflag [#allocation4], 1
    %1222 = vsyncpa %s1221, 1
    %1223 = vsyncpa [#allocation7], 1
    %s1224 = scalar_lea.sflag [#allocation7], 1
    %1225 = vsyncpa %s1224, 1
    %1226 = vsyncpa [#allocation5], 1
    %s1227 = scalar_lea.sflag [#allocation5], 1
    %1228 = vsyncpa %s1227, 1

</llo_original>
